<compile_context>
chip_gen: v6e
topology: v6e:2x2x1
jax: 0.10.0
libtpu: 0.0.40
codegen_flags: <defaults>
</compile_context>

<pallas_src>
import jax
import jax.numpy as jnp
from jax import lax
from jax.experimental import pallas as pl
from jax.experimental.pallas import tpu as pltpu

KH = KW = 3
PAD = KH // 2
EPS = 1e-5            # nn.BatchNorm2d default eps
NEG_SLOPE = 0.01      # nn.LeakyReLU default negative_slope


# ---------------------------------------------------------------------------
# Kernel 1: 3x3 same-conv for one batch element (banded-weight formulation)
#           + fused per-batch BatchNorm partial statistics.
#
#   x_ref:     (1, Cin, H, W)        native NCHW block (layout fold-in, no XLA transpose)
#   wband_ref: (Cin, KH, W, W*Cout)  banded weights: horizontal taps + horiz. zero-pad
#                                    folded in, so out[h, w*Cout+co] = sum_{c,kh}
#                                    xpad[c, h+kh, :] @ wband[c, kh]
#   y_ref:     (1, H, W*Cout)        lane-dense conv output (W*Cout = 128 here)
#   s1_ref:    (1, 1, W*Cout)        partial sum over h      (BN stats, fused)
#   s2_ref:    (1, 1, W*Cout)        partial sum of squares  (BN stats, fused)
#   xpad_ref:  (Cin, H+2, W)         VMEM scratch, vertical 1-row halo only
# ---------------------------------------------------------------------------
def conv_stats_kernel(x_ref, wband_ref, y_ref, s1_ref, s2_ref, xpad_ref):
    _, Cin, H, W = x_ref.shape
    WC = y_ref.shape[-1]

    # Zero ONLY the 1-row vertical halo; the interior is overwritten every step.
    # (Not gated on program_id: with "parallel" semantics each core must see a zero halo.)
    zrow = jnp.zeros((Cin, 1, W), jnp.float32)
    xpad_ref[:, 0:1, :] = zrow
    xpad_ref[:, H + 1:H + 2, :] = zrow
    xpad_ref[:, 1:H + 1, :] = x_ref[0]          # NCHW block dropped straight into VMEM

    # Cin*KH small MXU dots; no per-tap reshape/relayout, LHS is a plain sublane slice.
    acc = jnp.zeros((H, WC), jnp.float32)
    for c in range(Cin):
        for kh in range(KH):
            acc = acc + jnp.dot(xpad_ref[c, kh:kh + H, :], wband_ref[c, kh],
                                preferred_element_type=jnp.float32)

    # Conv bias intentionally omitted: under train-mode BatchNorm it only shifts the
    # batch mean (which is subtracted), so the layer output is unchanged.
    y_ref[0] = acc                                               # lane-dense store

    # Fused per-batch partial statistics (finished in the wrapper; tiny).
    s1_ref[0] = jnp.sum(acc, axis=0, keepdims=True)              # (1, W*Cout)
    s2_ref[0] = jnp.sum(acc * acc, axis=0, keepdims=True)        # (1, W*Cout)


# ---------------------------------------------------------------------------
# Kernel 2: per-channel affine (scale/shift precomputed) + LeakyReLU.
#           Full-image lane-dense (1, H, W*Cout) blocks, writes in place over y.
# ---------------------------------------------------------------------------
def bn_lrelu_kernel(y_ref, scale_ref, shift_ref, o_ref):
    out = y_ref[0] * scale_ref[...] + shift_ref[...]             # (H, WC) * (1, WC)
    o_ref[0] = jnp.where(out >= 0, out, NEG_SLOPE * out)


# ---------------------------------------------------------------------------
# Wrapper: PyTorch NCHW / OIHW in, NCHW out
# ---------------------------------------------------------------------------
def cnn_layer_forward(x_nchw, w_oihw, bias, gamma, beta):
    del bias  # cancels exactly under train-mode BatchNorm (see kernel comment)

    x = x_nchw.astype(jnp.float32)
    N, Cin, H, W = x.shape
    Cout = w_oihw.shape[0]
    WC = W * Cout

    # --- build banded weights: wband[c, kh, w_in, w_out*Cout + co] =
    #       wgt[kh, kw, c, co] if w_in == w_out + kw - 1 (else 0, i.e. horiz. zero-pad).
    # Built with exact 0/1-mask multiplies (pure data movement; no low-precision dot).
    w_kkco = jnp.transpose(w_oihw, (2, 3, 1, 0)).astype(jnp.float32)   # (KH, KW, Cin, Cout)
    wband = jnp.zeros((Cin, KH, W, W, Cout), jnp.float32)
    for kw in range(KW):
        diag = jnp.eye(W, k=1 - kw, dtype=jnp.float32)                 # (W_in, W_out)
        wk = jnp.transpose(w_kkco[:, kw], (1, 0, 2))                   # (Cin, KH, Cout)
        wband = wband + diag[None, None, :, :, None] * wk[:, :, None, None, :]
    wband = wband.reshape(Cin, KH, W, WC)

    # --- pass 1: conv + fused BN partial statistics, grid over batch ("parallel") ---
    conv_cost = pl.CostEstimate(
        flops=2 * N * Cin * KH * H * W * WC,
        transcendentals=0,
        bytes_accessed=4 * (N * Cin * H * W + Cin * KH * W * WC
                            + N * H * WC + 2 * N * WC))

    y, s1, s2 = pl.pallas_call(
        conv_stats_kernel,
        out_shape=(jax.ShapeDtypeStruct((N, H, WC), jnp.float32),
                   jax.ShapeDtypeStruct((N, 1, WC), jnp.float32),
                   jax.ShapeDtypeStruct((N, 1, WC), jnp.float32)),
        grid_spec=pltpu.PrefetchScalarGridSpec(
            num_scalar_prefetch=0,
            grid=(N,),
            in_specs=[
                pl.BlockSpec((1, Cin, H, W), lambda n: (n, 0, 0, 0)),
                pl.BlockSpec((Cin, KH, W, WC), lambda n: (0, 0, 0, 0)),
            ],
            out_specs=[
                pl.BlockSpec((1, H, WC), lambda n: (n, 0, 0)),
                pl.BlockSpec((1, 1, WC), lambda n: (n, 0, 0)),
                pl.BlockSpec((1, 1, WC), lambda n: (n, 0, 0)),
            ],
            scratch_shapes=[pltpu.VMEM((Cin, H + 2 * PAD, W), jnp.float32)],
        ),
        compiler_params=pltpu.CompilerParams(dimension_semantics=("parallel",)),
        cost_estimate=conv_cost,
    )(x, wband)

    # --- fold partial sums into per-channel scale/shift (tiny per-channel math) ---
    # NOTE: E[x^2]-E[x]^2 in f32 can cancel if |mean| >> std at large scale; a shifted
    # sum-of-squares would be safer there.  Fine at these magnitudes.
    n_elems = jnp.float32(N * H * W)
    s1c = jnp.sum(s1.reshape(N, W, Cout), axis=(0, 1))               # (Cout,)
    s2c = jnp.sum(s2.reshape(N, W, Cout), axis=(0, 1))
    mean = s1c / n_elems
    var = jnp.maximum(s2c / n_elems - mean * mean, 0.0)              # biased var (PyTorch)
    inv_std = lax.rsqrt(var + EPS)
    scale = gamma.astype(jnp.float32) * inv_std
    shift = beta.astype(jnp.float32) - mean * scale
    scale_row = jnp.tile(scale, W).reshape(1, WC)                    # lane = w*Cout + c
    shift_row = jnp.tile(shift, W).reshape(1, WC)

    # --- pass 2: normalize + LeakyReLU, full-image lane-dense blocks, in-place on y ---
    norm_cost = pl.CostEstimate(
        flops=4 * N * H * WC, transcendentals=0,
        bytes_accessed=4 * (2 * N * H * WC + 2 * WC))

    out_packed = pl.pallas_call(
        bn_lrelu_kernel,
        out_shape=jax.ShapeDtypeStruct((N, H, WC), jnp.float32),
        grid_spec=pltpu.PrefetchScalarGridSpec(
            num_scalar_prefetch=0,
            grid=(N,),
            in_specs=[
                pl.BlockSpec((1, H, WC), lambda n: (n, 0, 0)),
                pl.BlockSpec((1, WC), lambda n: (0, 0)),
                pl.BlockSpec((1, WC), lambda n: (0, 0)),
            ],
            out_specs=pl.BlockSpec((1, H, WC), lambda n: (n, 0, 0)),
        ),
        compiler_params=pltpu.CompilerParams(dimension_semantics=("parallel",)),
        cost_estimate=norm_cost,
        input_output_aliases={0: 0},          # write in place over y, no extra HBM buffer
    )(y, scale_row, shift_row)

    # PyTorch module returns NCHW; keeping NHWC end-to-end would drop this transpose.
    out_nhwc = out_packed.reshape(N, H, W, Cout)
    return jnp.transpose(out_nhwc, (0, 3, 1, 2))


# ---------------------------------------------------------------------------
# Pure-JAX reference (PyTorch semantics, including the conv bias) for verification
# ---------------------------------------------------------------------------
def reference_forward(x_nchw, w_oihw, bias, gamma, beta):
    y = lax.conv_general_dilated(
        x_nchw.astype(jnp.float32), w_oihw.astype(jnp.float32),
        window_strides=(1, 1), padding=((PAD, PAD), (PAD, PAD)),
        dimension_numbers=("NCHW", "OIHW", "NCHW"),
        precision=lax.Precision.HIGHEST)
    y = y + bias[None, :, None, None]
    mean = y.mean(axis=(0, 2, 3), keepdims=True)
    var = ((y - mean) ** 2).mean(axis=(0, 2, 3), keepdims=True)
    yhat = (y - mean) / jnp.sqrt(var + EPS)
    out = yhat * gamma[None, :, None, None] + beta[None, :, None, None]
    return jnp.where(out >= 0, out, NEG_SLOPE * out)


if __name__ == "__main__":
    # Small shapes consistent with CNNLayer(input_depth=4, output_depth=8, kernel_size=3)
    N, Cin, Cout, H, W = 2, 4, 8, 16, 16

    key = jax.random.PRNGKey(0)
    kx, kwgt, kb = jax.random.split(key, 3)

    x = jax.random.normal(kx, (N, Cin, H, W), jnp.float32)

    # Deterministic param init (mimics PyTorch default Conv2d init ranges)
    fan_in = Cin * KH * KW
    bound = 1.0 / (fan_in ** 0.5)
    w_oihw = jax.random.uniform(kwgt, (Cout, Cin, KH, KW), jnp.float32, -bound, bound)
    bias = jax.random.uniform(kb, (Cout,), jnp.float32, -bound, bound)
    gamma = jnp.ones((Cout,), jnp.float32)   # BatchNorm2d weight init
    beta = jnp.zeros((Cout,), jnp.float32)   # BatchNorm2d bias init

    forward = jax.jit(cnn_layer_forward)
    out = jax.block_until_ready(forward(x, w_oihw, bias, gamma, beta))

    ref = reference_forward(x, w_oihw, bias, gamma, beta)
    assert out.shape == (N, Cout, H, W)
    assert jnp.allclose(out, ref, atol=5e-4, rtol=5e-4), (
        f"max abs err {jnp.max(jnp.abs(out - ref))}")

    print("KERNEL_OK")
</pallas_src>

<mosaic_0001>
module attributes {stable_mosaic.version = 11 : i64} {
  func.func @conv_stats_kernel(%arg0: i32, %arg1: memref<1x4x16x16xf32, #tpu.memory_space<vmem>>, %arg2: memref<4x3x16x128xf32, #tpu.memory_space<vmem>>, %arg3: memref<1x16x128xf32, #tpu.memory_space<vmem>>, %arg4: memref<1x1x128xf32, #tpu.memory_space<vmem>>, %arg5: memref<1x1x128xf32, #tpu.memory_space<vmem>>, %arg6: memref<4x18x16xf32, #tpu.memory_space<vmem>>) attributes {dimension_semantics = [#tpu.dimension_semantics<parallel>], iteration_bounds = array<i64: 2>, scalar_prefetch = 0 : i64, scratch_operands = 1 : i64, tpu.core_type = #tpu.core_type<tc>, window_params = [{transform_indices = @transform_0, window_bounds = array<i64: 1, 4, 16, 16>}, {pipeline_mode = #tpu.pipeline_mode<synchronous>, transform_indices = @transform_1, window_bounds = array<i64: 4, 3, 16, 128>}, {transform_indices = @transform_2, window_bounds = array<i64: 1, 16, 128>}, {transform_indices = @transform_3, window_bounds = array<i64: 1, 1, 128>}, {transform_indices = @transform_4, window_bounds = array<i64: 1, 1, 128>}]} {
    %cst = arith.constant 0.000000e+00 : f32
    %0 = vector.broadcast %cst : f32 to vector<4x1x16xf32>
    %c0 = arith.constant 0 : index
    %c0_0 = arith.constant 0 : index
    %c0_1 = arith.constant 0 : index
    %1 = vector.load %arg6[%c0, %c0_0, %c0_1] : memref<4x18x16xf32, #tpu.memory_space<vmem>>, vector<4x1x16xf32>
    tpu.vector_store %arg6[%c0, %c0_0, %c0_1], %0 {strides = array<i32>} : memref<4x18x16xf32, #tpu.memory_space<vmem>>, vector<4x1x16xf32>,
    %c0_2 = arith.constant 0 : index
    %c17 = arith.constant 17 : index
    %c0_3 = arith.constant 0 : index
    %2 = vector.load %arg6[%c0_2, %c17, %c0_3] : memref<4x18x16xf32, #tpu.memory_space<vmem>>, vector<4x1x16xf32>
    tpu.vector_store %arg6[%c0_2, %c17, %c0_3], %0 {strides = array<i32>} : memref<4x18x16xf32, #tpu.memory_space<vmem>>, vector<4x1x16xf32>,
    %c0_4 = arith.constant 0 : index
    %c0_5 = arith.constant 0 : index
    %c0_6 = arith.constant 0 : index
    %c0_7 = arith.constant 0 : index
    %3 = vector.load %arg1[%c0_4, %c0_5, %c0_6, %c0_7] : memref<1x4x16x16xf32, #tpu.memory_space<vmem>>, vector<1x4x16x16xf32>
    %4 = vector.shape_cast %3 : vector<1x4x16x16xf32> to vector<4x16x16xf32>
    %c0_8 = arith.constant 0 : index
    %c1 = arith.constant 1 : index
    %c0_9 = arith.constant 0 : index
    %5 = vector.load %arg6[%c0_8, %c1, %c0_9] : memref<4x18x16xf32, #tpu.memory_space<vmem>>, vector<4x16x16xf32>
    tpu.vector_store %arg6[%c0_8, %c1, %c0_9], %4 {strides = array<i32>} : memref<4x18x16xf32, #tpu.memory_space<vmem>>, vector<4x16x16xf32>,
    %cst_10 = arith.constant 0.000000e+00 : f32
    %6 = vector.broadcast %cst_10 : f32 to vector<16x128xf32>
    %c0_11 = arith.constant 0 : index
    %c0_12 = arith.constant 0 : index
    %c0_13 = arith.constant 0 : index
    %7 = vector.load %arg6[%c0_11, %c0_12, %c0_13] : memref<4x18x16xf32, #tpu.memory_space<vmem>>, vector<1x16x16xf32>
    %8 = vector.shape_cast %7 : vector<1x16x16xf32> to vector<16x16xf32>
    %c0_14 = arith.constant 0 : index
    %c0_15 = arith.constant 0 : index
    %c0_16 = arith.constant 0 : index
    %c0_17 = arith.constant 0 : index
    %9 = vector.load %arg2[%c0_14, %c0_15, %c0_16, %c0_17] : memref<4x3x16x128xf32, #tpu.memory_space<vmem>>, vector<1x1x16x128xf32>
    %10 = vector.shape_cast %9 : vector<1x1x16x128xf32> to vector<16x128xf32>
    %cst_18 = arith.constant dense<0.000000e+00> : vector<16x128xf32>
    %11 = tpu.matmul %8, %10, %cst_18 {dimension_numbers = #tpu.dot_dimension_numbers<[1], [0], [0], [1], [0, 0, 1, 1], [], []>} : vector<16x16xf32>, vector<16x128xf32>, vector<16x128xf32> -> vector<16x128xf32>
    %12 = arith.addf %6, %11 : vector<16x128xf32>
    %c0_19 = arith.constant 0 : index
    %c1_20 = arith.constant 1 : index
    %c0_21 = arith.constant 0 : index
    %13 = vector.load %arg6[%c0_19, %c1_20, %c0_21] : memref<4x18x16xf32, #tpu.memory_space<vmem>>, vector<1x16x16xf32>
    %14 = vector.shape_cast %13 : vector<1x16x16xf32> to vector<16x16xf32>
    %c0_22 = arith.constant 0 : index
    %c1_23 = arith.constant 1 : index
    %c0_24 = arith.constant 0 : index
    %c0_25 = arith.constant 0 : index
    %15 = vector.load %arg2[%c0_22, %c1_23, %c0_24, %c0_25] : memref<4x3x16x128xf32, #tpu.memory_space<vmem>>, vector<1x1x16x128xf32>
    %16 = vector.shape_cast %15 : vector<1x1x16x128xf32> to vector<16x128xf32>
    %cst_26 = arith.constant dense<0.000000e+00> : vector<16x128xf32>
    %17 = tpu.matmul %14, %16, %cst_26 {dimension_numbers = #tpu.dot_dimension_numbers<[1], [0], [0], [1], [0, 0, 1, 1], [], []>} : vector<16x16xf32>, vector<16x128xf32>, vector<16x128xf32> -> vector<16x128xf32>
    %18 = arith.addf %12, %17 : vector<16x128xf32>
    %c0_27 = arith.constant 0 : index
    %c2 = arith.constant 2 : index
    %c0_28 = arith.constant 0 : index
    %19 = vector.load %arg6[%c0_27, %c2, %c0_28] : memref<4x18x16xf32, #tpu.memory_space<vmem>>, vector<1x16x16xf32>
    %20 = vector.shape_cast %19 : vector<1x16x16xf32> to vector<16x16xf32>
    %c0_29 = arith.constant 0 : index
    %c2_30 = arith.constant 2 : index
    %c0_31 = arith.constant 0 : index
    %c0_32 = arith.constant 0 : index
    %21 = vector.load %arg2[%c0_29, %c2_30, %c0_31, %c0_32] : memref<4x3x16x128xf32, #tpu.memory_space<vmem>>, vector<1x1x16x128xf32>
    %22 = vector.shape_cast %21 : vector<1x1x16x128xf32> to vector<16x128xf32>
    %cst_33 = arith.constant dense<0.000000e+00> : vector<16x128xf32>
    %23 = tpu.matmul %20, %22, %cst_33 {dimension_numbers = #tpu.dot_dimension_numbers<[1], [0], [0], [1], [0, 0, 1, 1], [], []>} : vector<16x16xf32>, vector<16x128xf32>, vector<16x128xf32> -> vector<16x128xf32>
    %24 = arith.addf %18, %23 : vector<16x128xf32>
    %c1_34 = arith.constant 1 : index
    %c0_35 = arith.constant 0 : index
    %c0_36 = arith.constant 0 : index
    %25 = vector.load %arg6[%c1_34, %c0_35, %c0_36] : memref<4x18x16xf32, #tpu.memory_space<vmem>>, vector<1x16x16xf32>
    %26 = vector.shape_cast %25 : vector<1x16x16xf32> to vector<16x16xf32>
    %c1_37 = arith.constant 1 : index
    %c0_38 = arith.constant 0 : index
    %c0_39 = arith.constant 0 : index
    %c0_40 = arith.constant 0 : index
    %27 = vector.load %arg2[%c1_37, %c0_38, %c0_39, %c0_40] : memref<4x3x16x128xf32, #tpu.memory_space<vmem>>, vector<1x1x16x128xf32>
    %28 = vector.shape_cast %27 : vector<1x1x16x128xf32> to vector<16x128xf32>
    %cst_41 = arith.constant dense<0.000000e+00> : vector<16x128xf32>
    %29 = tpu.matmul %26, %28, %cst_41 {dimension_numbers = #tpu.dot_dimension_numbers<[1], [0], [0], [1], [0, 0, 1, 1], [], []>} : vector<16x16xf32>, vector<16x128xf32>, vector<16x128xf32> -> vector<16x128xf32>
    %30 = arith.addf %24, %29 : vector<16x128xf32>
    %c1_42 = arith.constant 1 : index
    %c1_43 = arith.constant 1 : index
    %c0_44 = arith.constant 0 : index
    %31 = vector.load %arg6[%c1_42, %c1_43, %c0_44] : memref<4x18x16xf32, #tpu.memory_space<vmem>>, vector<1x16x16xf32>
    %32 = vector.shape_cast %31 : vector<1x16x16xf32> to vector<16x16xf32>
    %c1_45 = arith.constant 1 : index
    %c1_46 = arith.constant 1 : index
    %c0_47 = arith.constant 0 : index
    %c0_48 = arith.constant 0 : index
    %33 = vector.load %arg2[%c1_45, %c1_46, %c0_47, %c0_48] : memref<4x3x16x128xf32, #tpu.memory_space<vmem>>, vector<1x1x16x128xf32>
    %34 = vector.shape_cast %33 : vector<1x1x16x128xf32> to vector<16x128xf32>
    %cst_49 = arith.constant dense<0.000000e+00> : vector<16x128xf32>
    %35 = tpu.matmul %32, %34, %cst_49 {dimension_numbers = #tpu.dot_dimension_numbers<[1], [0], [0], [1], [0, 0, 1, 1], [], []>} : vector<16x16xf32>, vector<16x128xf32>, vector<16x128xf32> -> vector<16x128xf32>
    %36 = arith.addf %30, %35 : vector<16x128xf32>
    %c1_50 = arith.constant 1 : index
    %c2_51 = arith.constant 2 : index
    %c0_52 = arith.constant 0 : index
    %37 = vector.load %arg6[%c1_50, %c2_51, %c0_52] : memref<4x18x16xf32, #tpu.memory_space<vmem>>, vector<1x16x16xf32>
    %38 = vector.shape_cast %37 : vector<1x16x16xf32> to vector<16x16xf32>
    %c1_53 = arith.constant 1 : index
    %c2_54 = arith.constant 2 : index
    %c0_55 = arith.constant 0 : index
    %c0_56 = arith.constant 0 : index
    %39 = vector.load %arg2[%c1_53, %c2_54, %c0_55, %c0_56] : memref<4x3x16x128xf32, #tpu.memory_space<vmem>>, vector<1x1x16x128xf32>
    %40 = vector.shape_cast %39 : vector<1x1x16x128xf32> to vector<16x128xf32>
    %cst_57 = arith.constant dense<0.000000e+00> : vector<16x128xf32>
    %41 = tpu.matmul %38, %40, %cst_57 {dimension_numbers = #tpu.dot_dimension_numbers<[1], [0], [0], [1], [0, 0, 1, 1], [], []>} : vector<16x16xf32>, vector<16x128xf32>, vector<16x128xf32> -> vector<16x128xf32>
    %42 = arith.addf %36, %41 : vector<16x128xf32>
    %c2_58 = arith.constant 2 : index
    %c0_59 = arith.constant 0 : index
    %c0_60 = arith.constant 0 : index
    %43 = vector.load %arg6[%c2_58, %c0_59, %c0_60] : memref<4x18x16xf32, #tpu.memory_space<vmem>>, vector<1x16x16xf32>
    %44 = vector.shape_cast %43 : vector<1x16x16xf32> to vector<16x16xf32>
    %c2_61 = arith.constant 2 : index
    %c0_62 = arith.constant 0 : index
    %c0_63 = arith.constant 0 : index
    %c0_64 = arith.constant 0 : index
    %45 = vector.load %arg2[%c2_61, %c0_62, %c0_63, %c0_64] : memref<4x3x16x128xf32, #tpu.memory_space<vmem>>, vector<1x1x16x128xf32>
    %46 = vector.shape_cast %45 : vector<1x1x16x128xf32> to vector<16x128xf32>
    %cst_65 = arith.constant dense<0.000000e+00> : vector<16x128xf32>
    %47 = tpu.matmul %44, %46, %cst_65 {dimension_numbers = #tpu.dot_dimension_numbers<[1], [0], [0], [1], [0, 0, 1, 1], [], []>} : vector<16x16xf32>, vector<16x128xf32>, vector<16x128xf32> -> vector<16x128xf32>
    %48 = arith.addf %42, %47 : vector<16x128xf32>
    %c2_66 = arith.constant 2 : index
    %c1_67 = arith.constant 1 : index
    %c0_68 = arith.constant 0 : index
    %49 = vector.load %arg6[%c2_66, %c1_67, %c0_68] : memref<4x18x16xf32, #tpu.memory_space<vmem>>, vector<1x16x16xf32>
    %50 = vector.shape_cast %49 : vector<1x16x16xf32> to vector<16x16xf32>
    %c2_69 = arith.constant 2 : index
    %c1_70 = arith.constant 1 : index
    %c0_71 = arith.constant 0 : index
    %c0_72 = arith.constant 0 : index
    %51 = vector.load %arg2[%c2_69, %c1_70, %c0_71, %c0_72] : memref<4x3x16x128xf32, #tpu.memory_space<vmem>>, vector<1x1x16x128xf32>
    %52 = vector.shape_cast %51 : vector<1x1x16x128xf32> to vector<16x128xf32>
    %cst_73 = arith.constant dense<0.000000e+00> : vector<16x128xf32>
    %53 = tpu.matmul %50, %52, %cst_73 {dimension_numbers = #tpu.dot_dimension_numbers<[1], [0], [0], [1], [0, 0, 1, 1], [], []>} : vector<16x16xf32>, vector<16x128xf32>, vector<16x128xf32> -> vector<16x128xf32>
    %54 = arith.addf %48, %53 : vector<16x128xf32>
    %c2_74 = arith.constant 2 : index
    %c2_75 = arith.constant 2 : index
    %c0_76 = arith.constant 0 : index
    %55 = vector.load %arg6[%c2_74, %c2_75, %c0_76] : memref<4x18x16xf32, #tpu.memory_space<vmem>>, vector<1x16x16xf32>
    %56 = vector.shape_cast %55 : vector<1x16x16xf32> to vector<16x16xf32>
    %c2_77 = arith.constant 2 : index
    %c2_78 = arith.constant 2 : index
    %c0_79 = arith.constant 0 : index
    %c0_80 = arith.constant 0 : index
    %57 = vector.load %arg2[%c2_77, %c2_78, %c0_79, %c0_80] : memref<4x3x16x128xf32, #tpu.memory_space<vmem>>, vector<1x1x16x128xf32>
    %58 = vector.shape_cast %57 : vector<1x1x16x128xf32> to vector<16x128xf32>
    %cst_81 = arith.constant dense<0.000000e+00> : vector<16x128xf32>
    %59 = tpu.matmul %56, %58, %cst_81 {dimension_numbers = #tpu.dot_dimension_numbers<[1], [0], [0], [1], [0, 0, 1, 1], [], []>} : vector<16x16xf32>, vector<16x128xf32>, vector<16x128xf32> -> vector<16x128xf32>
    %60 = arith.addf %54, %59 : vector<16x128xf32>
    %c3 = arith.constant 3 : index
    %c0_82 = arith.constant 0 : index
    %c0_83 = arith.constant 0 : index
    %61 = vector.load %arg6[%c3, %c0_82, %c0_83] : memref<4x18x16xf32, #tpu.memory_space<vmem>>, vector<1x16x16xf32>
    %62 = vector.shape_cast %61 : vector<1x16x16xf32> to vector<16x16xf32>
    %c3_84 = arith.constant 3 : index
    %c0_85 = arith.constant 0 : index
    %c0_86 = arith.constant 0 : index
    %c0_87 = arith.constant 0 : index
    %63 = vector.load %arg2[%c3_84, %c0_85, %c0_86, %c0_87] : memref<4x3x16x128xf32, #tpu.memory_space<vmem>>, vector<1x1x16x128xf32>
    %64 = vector.shape_cast %63 : vector<1x1x16x128xf32> to vector<16x128xf32>
    %cst_88 = arith.constant dense<0.000000e+00> : vector<16x128xf32>
    %65 = tpu.matmul %62, %64, %cst_88 {dimension_numbers = #tpu.dot_dimension_numbers<[1], [0], [0], [1], [0, 0, 1, 1], [], []>} : vector<16x16xf32>, vector<16x128xf32>, vector<16x128xf32> -> vector<16x128xf32>
    %66 = arith.addf %60, %65 : vector<16x128xf32>
    %c3_89 = arith.constant 3 : index
    %c1_90 = arith.constant 1 : index
    %c0_91 = arith.constant 0 : index
    %67 = vector.load %arg6[%c3_89, %c1_90, %c0_91] : memref<4x18x16xf32, #tpu.memory_space<vmem>>, vector<1x16x16xf32>
    %68 = vector.shape_cast %67 : vector<1x16x16xf32> to vector<16x16xf32>
    %c3_92 = arith.constant 3 : index
    %c1_93 = arith.constant 1 : index
    %c0_94 = arith.constant 0 : index
    %c0_95 = arith.constant 0 : index
    %69 = vector.load %arg2[%c3_92, %c1_93, %c0_94, %c0_95] : memref<4x3x16x128xf32, #tpu.memory_space<vmem>>, vector<1x1x16x128xf32>
    %70 = vector.shape_cast %69 : vector<1x1x16x128xf32> to vector<16x128xf32>
    %cst_96 = arith.constant dense<0.000000e+00> : vector<16x128xf32>
    %71 = tpu.matmul %68, %70, %cst_96 {dimension_numbers = #tpu.dot_dimension_numbers<[1], [0], [0], [1], [0, 0, 1, 1], [], []>} : vector<16x16xf32>, vector<16x128xf32>, vector<16x128xf32> -> vector<16x128xf32>
    %72 = arith.addf %66, %71 : vector<16x128xf32>
    %c3_97 = arith.constant 3 : index
    %c2_98 = arith.constant 2 : index
    %c0_99 = arith.constant 0 : index
    %73 = vector.load %arg6[%c3_97, %c2_98, %c0_99] : memref<4x18x16xf32, #tpu.memory_space<vmem>>, vector<1x16x16xf32>
    %74 = vector.shape_cast %73 : vector<1x16x16xf32> to vector<16x16xf32>
    %c3_100 = arith.constant 3 : index
    %c2_101 = arith.constant 2 : index
    %c0_102 = arith.constant 0 : index
    %c0_103 = arith.constant 0 : index
    %75 = vector.load %arg2[%c3_100, %c2_101, %c0_102, %c0_103] : memref<4x3x16x128xf32, #tpu.memory_space<vmem>>, vector<1x1x16x128xf32>
    %76 = vector.shape_cast %75 : vector<1x1x16x128xf32> to vector<16x128xf32>
    %cst_104 = arith.constant dense<0.000000e+00> : vector<16x128xf32>
    %77 = tpu.matmul %74, %76, %cst_104 {dimension_numbers = #tpu.dot_dimension_numbers<[1], [0], [0], [1], [0, 0, 1, 1], [], []>} : vector<16x16xf32>, vector<16x128xf32>, vector<16x128xf32> -> vector<16x128xf32>
    %78 = arith.addf %72, %77 : vector<16x128xf32>
    %c0_105 = arith.constant 0 : index
    %c0_106 = arith.constant 0 : index
    %c0_107 = arith.constant 0 : index
    %79 = vector.load %arg3[%c0_105, %c0_106, %c0_107] : memref<1x16x128xf32, #tpu.memory_space<vmem>>, vector<1x16x128xf32>
    %80 = vector.shape_cast %79 : vector<1x16x128xf32> to vector<16x128xf32>
    %81 = vector.shape_cast %78 : vector<16x128xf32> to vector<1x16x128xf32>
    tpu.vector_store %arg3[%c0_105, %c0_106, %c0_107], %81 {strides = array<i32>} : memref<1x16x128xf32, #tpu.memory_space<vmem>>, vector<1x16x128xf32>,
    %cst_108 = arith.constant dense<0.000000e+00> : vector<128xf32>
    %82 = vector.multi_reduction <add>, %78, %cst_108 [0] : vector<16x128xf32> to vector<128xf32>
    %83 = vector.shape_cast %82 : vector<128xf32> to vector<1x128xf32>
    %c0_109 = arith.constant 0 : index
    %c0_110 = arith.constant 0 : index
    %c0_111 = arith.constant 0 : index
    %84 = vector.load %arg4[%c0_109, %c0_110, %c0_111] : memref<1x1x128xf32, #tpu.memory_space<vmem>>, vector<1x1x128xf32>
    %85 = vector.shape_cast %84 : vector<1x1x128xf32> to vector<1x128xf32>
    %86 = vector.shape_cast %83 : vector<1x128xf32> to vector<1x1x128xf32>
    tpu.vector_store %arg4[%c0_109, %c0_110, %c0_111], %86 {strides = array<i32>} : memref<1x1x128xf32, #tpu.memory_space<vmem>>, vector<1x1x128xf32>,
    %87 = arith.mulf %78, %78 : vector<16x128xf32>
    %cst_112 = arith.constant dense<0.000000e+00> : vector<128xf32>
    %88 = vector.multi_reduction <add>, %87, %cst_112 [0] : vector<16x128xf32> to vector<128xf32>
    %89 = vector.shape_cast %88 : vector<128xf32> to vector<1x128xf32>
    %c0_113 = arith.constant 0 : index
    %c0_114 = arith.constant 0 : index
    %c0_115 = arith.constant 0 : index
    %90 = vector.load %arg5[%c0_113, %c0_114, %c0_115] : memref<1x1x128xf32, #tpu.memory_space<vmem>>, vector<1x1x128xf32>
    %91 = vector.shape_cast %90 : vector<1x1x128xf32> to vector<1x128xf32>
    %92 = vector.shape_cast %89 : vector<1x128xf32> to vector<1x1x128xf32>
    tpu.vector_store %arg5[%c0_113, %c0_114, %c0_115], %92 {strides = array<i32>} : memref<1x1x128xf32, #tpu.memory_space<vmem>>, vector<1x1x128xf32>,
    return
  }
  func.func @transform_0(%arg0: i32) -> (i32, i32, i32, i32) {
    %c0_i32 = arith.constant 0 : i32
    %c0_i32_0 = arith.constant 0 : i32
    %c0_i32_1 = arith.constant 0 : i32
    %c0_i32_2 = arith.constant 0 : i32
    return %arg0, %c0_i32, %c0_i32_0, %c0_i32_1 : i32, i32, i32, i32
  }
  func.func @transform_1(%arg0: i32) -> (i32, i32, i32, i32) {
    %c0_i32 = arith.constant 0 : i32
    %c0_i32_0 = arith.constant 0 : i32
    %c0_i32_1 = arith.constant 0 : i32
    %c0_i32_2 = arith.constant 0 : i32
    %c0_i32_3 = arith.constant 0 : i32
    return %c0_i32, %c0_i32_0, %c0_i32_1, %c0_i32_2 : i32, i32, i32, i32
  }
  func.func @transform_2(%arg0: i32) -> (i32, i32, i32) {
    %c0_i32 = arith.constant 0 : i32
    %c0_i32_0 = arith.constant 0 : i32
    %c0_i32_1 = arith.constant 0 : i32
    return %arg0, %c0_i32, %c0_i32_0 : i32, i32, i32
  }
  func.func @transform_3(%arg0: i32) -> (i32, i32, i32) {
    %c0_i32 = arith.constant 0 : i32
    %c0_i32_0 = arith.constant 0 : i32
    %c0_i32_1 = arith.constant 0 : i32
    return %arg0, %c0_i32, %c0_i32_0 : i32, i32, i32
  }
  func.func @transform_4(%arg0: i32) -> (i32, i32, i32) {
    %c0_i32 = arith.constant 0 : i32
    %c0_i32_0 = arith.constant 0 : i32
    %c0_i32_1 = arith.constant 0 : i32
    return %arg0, %c0_i32, %c0_i32_0 : i32, i32, i32
  }
}

module attributes {stable_mosaic.version = 11 : i64} {
  func.func @bn_lrelu_kernel(%arg0: i32, %arg1: memref<1x16x128xf32, #tpu.memory_space<vmem>>, %arg2: memref<1x128xf32, #tpu.memory_space<vmem>>, %arg3: memref<1x128xf32, #tpu.memory_space<vmem>>, %arg4: memref<1x16x128xf32, #tpu.memory_space<vmem>>) attributes {dimension_semantics = [#tpu.dimension_semantics<parallel>], iteration_bounds = array<i64: 2>, scalar_prefetch = 0 : i64, scratch_operands = 0 : i64, tpu.core_type = #tpu.core_type<tc>, window_params = [{transform_indices = @transform_0, window_bounds = array<i64: 1, 16, 128>}, {pipeline_mode = #tpu.pipeline_mode<synchronous>, transform_indices = @transform_1, window_bounds = array<i64: 1, 128>}, {pipeline_mode = #tpu.pipeline_mode<synchronous>, transform_indices = @transform_2, window_bounds = array<i64: 1, 128>}, {transform_indices = @transform_3, window_bounds = array<i64: 1, 16, 128>}]} {
    %c0 = arith.constant 0 : index
    %c0_0 = arith.constant 0 : index
    %c0_1 = arith.constant 0 : index
    %0 = vector.load %arg1[%c0, %c0_0, %c0_1] : memref<1x16x128xf32, #tpu.memory_space<vmem>>, vector<1x16x128xf32>
    %1 = vector.shape_cast %0 : vector<1x16x128xf32> to vector<16x128xf32>
    %c0_2 = arith.constant 0 : index
    %c0_3 = arith.constant 0 : index
    %2 = vector.load %arg2[%c0_2, %c0_3] : memref<1x128xf32, #tpu.memory_space<vmem>>, vector<1x128xf32>
    %3 = vector.broadcast %2 : vector<1x128xf32> to vector<16x128xf32>
    %4 = arith.mulf %1, %3 : vector<16x128xf32>
    %c0_4 = arith.constant 0 : index
    %c0_5 = arith.constant 0 : index
    %5 = vector.load %arg3[%c0_4, %c0_5] : memref<1x128xf32, #tpu.memory_space<vmem>>, vector<1x128xf32>
    %6 = vector.broadcast %5 : vector<1x128xf32> to vector<16x128xf32>
    %7 = arith.addf %4, %6 : vector<16x128xf32>
    %cst = arith.constant 0.000000e+00 : f32
    %8 = vector.broadcast %cst : f32 to vector<16x128xf32>
    %9 = arith.cmpf oge, %7, %8 : vector<16x128xf32>
    %cst_6 = arith.constant 0.00999999977 : f32
    %10 = vector.broadcast %cst_6 : f32 to vector<16x128xf32>
    %11 = arith.mulf %10, %7 : vector<16x128xf32>
    %12 = arith.select %9, %7, %11 : vector<16x128xi1>, vector<16x128xf32>
    %c0_7 = arith.constant 0 : index
    %c0_8 = arith.constant 0 : index
    %c0_9 = arith.constant 0 : index
    %13 = vector.load %arg4[%c0_7, %c0_8, %c0_9] : memref<1x16x128xf32, #tpu.memory_space<vmem>>, vector<1x16x128xf32>
    %14 = vector.shape_cast %13 : vector<1x16x128xf32> to vector<16x128xf32>
    %15 = vector.shape_cast %12 : vector<16x128xf32> to vector<1x16x128xf32>
    tpu.vector_store %arg4[%c0_7, %c0_8, %c0_9], %15 {strides = array<i32>} : memref<1x16x128xf32, #tpu.memory_space<vmem>>, vector<1x16x128xf32>,
    return
  }
  func.func @transform_0(%arg0: i32) -> (i32, i32, i32) {
    %c0_i32 = arith.constant 0 : i32
    %c0_i32_0 = arith.constant 0 : i32
    %c0_i32_1 = arith.constant 0 : i32
    return %arg0, %c0_i32, %c0_i32_0 : i32, i32, i32
  }
  func.func @transform_1(%arg0: i32) -> (i32, i32) {
    %c0_i32 = arith.constant 0 : i32
    %c0_i32_0 = arith.constant 0 : i32
    %c0_i32_1 = arith.constant 0 : i32
    return %c0_i32, %c0_i32_0 : i32, i32
  }
  func.func @transform_2(%arg0: i32) -> (i32, i32) {
    %c0_i32 = arith.constant 0 : i32
    %c0_i32_0 = arith.constant 0 : i32
    %c0_i32_1 = arith.constant 0 : i32
    return %c0_i32, %c0_i32_0 : i32, i32
  }
  func.func @transform_3(%arg0: i32) -> (i32, i32, i32) {
    %c0_i32 = arith.constant 0 : i32
    %c0_i32_0 = arith.constant 0 : i32
    %c0_i32_1 = arith.constant 0 : i32
    return %arg0, %c0_i32, %c0_i32_0 : i32, i32, i32
  }
}

</mosaic_0001>

<llo_original>
// kernel: tile.18
$region0: #{tile.18}
  #allocation0 [shape = 's32[1]{0}', space=sflag, size = 0x4, scoped, tag = 'scoped memory for tile.18']
  %s0 = inlined_call_operand.vmem [shape: f32[8], index: 0, kind: input, shape index: {}]
  %s1 = inlined_call_operand.vmem [shape: f32[16,8], index: 1, kind: output, shape index: {}]
  // Predicated region
  $region2: #{tile.18} parent=0 // pred_check
    _
  $region3: #{tile.18} parent=0 // pred_check_branch
    %3 = sbr.rel (0) target = $region5
  $region4: #{tile.18} parent=0 // pred_region
    _
  $region5: #{tile.18} parent=0 // pred_fallthru
    _
  %v4 = vld [vmem:[%s0] ss:$0 sm:$0xff]
  %5 = vst [vmem:[%s1] sm:$0xff] %v4
  %s6 = scalar_lea.vmem %s1, 8
  %7 = vst [vmem:[%s6] sm:$0xff] %v4

// kernel: tile.19
$region0: #{tile.19}
  %s0 = inlined_call_operand.vmem [shape: f32[16,8], index: 0, kind: input, shape index: {}]
  %s1 = inlined_call_operand.vmem [shape: f32[1,128], index: 1, kind: output, shape index: {}]
  $region1: #{tile.19} parent=0
    #allocation0 [shape = 'u8[4096]{0}', space=vmem, size = 0x1000, scoped, tag = 'scoped mem for output reshape']
    %v2 = vld [vmem:[%s0] sm:$0x1]
    %vm3 = vcmask 64512
    %4 = vst.msk [vmem:[#allocation0] sm:$0x1] %vm3, %v2
    %s5 = scalar_lea.vmem %s0, 15
    %v6 = vld [vmem:[%s5] sm:$0x1]
    %7 = vrot.lane.b32.xlu0 %v6, 120
    %v8 = vpop.permute.xlu0 %7
    %vm9 = vcmask 1048512
    %10 = vst.msk [vmem:[#allocation0] sm:$0x1] %vm9, %v8
    %s11 = scalar_lea.vmem %s0, 14
    %v12 = vld [vmem:[%s11] sm:$0x1]
    %13 = vrot.lane.b32.xlu0 %v12, 112
    %v14 = vpop.permute.xlu0 %13
    %vm15 = vcmask 982912
    %16 = vst.msk [vmem:[#allocation0] sm:$0x1] %vm15, %v14
    %s17 = scalar_lea.vmem %s0, 13
    %v18 = vld [vmem:[%s17] sm:$0x1]
    %19 = vrot.lane.b32.xlu0 %v18, 104
    %v20 = vpop.permute.xlu0 %19
    %vm21 = vcmask 917312
    %22 = vst.msk [vmem:[#allocation0] sm:$0x1] %vm21, %v20
    %s23 = scalar_lea.vmem %s0, 12
    %v24 = vld [vmem:[%s23] sm:$0x1]
    %25 = vrot.lane.b32.xlu0 %v24, 96
    %v26 = vpop.permute.xlu0 %25
    %vm27 = vcmask 851712
    %28 = vst.msk [vmem:[#allocation0] sm:$0x1] %vm27, %v26
    %s29 = scalar_lea.vmem %s0, 11
    %v30 = vld [vmem:[%s29] sm:$0x1]
    %31 = vrot.lane.b32.xlu0 %v30, 88
    %v32 = vpop.permute.xlu0 %31
    %vm33 = vcmask 786112
    %34 = vst.msk [vmem:[#allocation0] sm:$0x1] %vm33, %v32
    %s35 = scalar_lea.vmem %s0, 10
    %v36 = vld [vmem:[%s35] sm:$0x1]
    %37 = vrot.lane.b32.xlu0 %v36, 80
    %v38 = vpop.permute.xlu0 %37
    %vm39 = vcmask 720512
    %40 = vst.msk [vmem:[#allocation0] sm:$0x1] %vm39, %v38
    %s41 = scalar_lea.vmem %s0, 9
    %v42 = vld [vmem:[%s41] sm:$0x1]
    %43 = vrot.lane.b32.xlu0 %v42, 72
    %v44 = vpop.permute.xlu0 %43
    %vm45 = vcmask 654912
    %46 = vst.msk [vmem:[#allocation0] sm:$0x1] %vm45, %v44
    %s47 = scalar_lea.vmem %s0, 8
    %v48 = vld [vmem:[%s47] sm:$0x1]
    %49 = vrot.lane.b32.xlu0 %v48, 64
    %v50 = vpop.permute.xlu0 %49
    %vm51 = vcmask 589312
    %52 = vst.msk [vmem:[#allocation0] sm:$0x1] %vm51, %v50
    %s53 = scalar_lea.vmem %s0, 7
    %v54 = vld [vmem:[%s53] sm:$0x1]
    %55 = vrot.lane.b32.xlu0 %v54, 56
    %v56 = vpop.permute.xlu0 %55
    %vm57 = vcmask 523712
    %58 = vst.msk [vmem:[#allocation0] sm:$0x1] %vm57, %v56
    %s59 = scalar_lea.vmem %s0, 6
    %v60 = vld [vmem:[%s59] sm:$0x1]
    %61 = vrot.lane.b32.xlu0 %v60, 48
    %v62 = vpop.permute.xlu0 %61
    %vm63 = vcmask 458112
    %64 = vst.msk [vmem:[#allocation0] sm:$0x1] %vm63, %v62
    %s65 = scalar_lea.vmem %s0, 5
    %v66 = vld [vmem:[%s65] sm:$0x1]
    %67 = vrot.lane.b32.xlu0 %v66, 40
    %v68 = vpop.permute.xlu0 %67
    %vm69 = vcmask 392512
    %70 = vst.msk [vmem:[#allocation0] sm:$0x1] %vm69, %v68
    %s71 = scalar_lea.vmem %s0, 4
    %v72 = vld [vmem:[%s71] sm:$0x1]
    %73 = vrot.lane.b32.xlu0 %v72, 32
    %v74 = vpop.permute.xlu0 %73
    %vm75 = vcmask 326912
    %76 = vst.msk [vmem:[#allocation0] sm:$0x1] %vm75, %v74
    %s77 = scalar_lea.vmem %s0, 3
    %v78 = vld [vmem:[%s77] sm:$0x1]
    %79 = vrot.lane.b32.xlu0 %v78, 24
    %v80 = vpop.permute.xlu0 %79
    %vm81 = vcmask 261312
    %82 = vst.msk [vmem:[#allocation0] sm:$0x1] %vm81, %v80
    %s83 = scalar_lea.vmem %s0, 2
    %v84 = vld [vmem:[%s83] sm:$0x1]
    %85 = vrot.lane.b32.xlu0 %v84, 16
    %v86 = vpop.permute.xlu0 %85
    %vm87 = vcmask 195712
    %88 = vst.msk [vmem:[#allocation0] sm:$0x1] %vm87, %v86
    %s89 = scalar_lea.vmem %s0, 1
    %v90 = vld [vmem:[%s89] sm:$0x1]
    %91 = vrot.lane.b32.xlu0 %v90, 8
    %v92 = vpop.permute.xlu0 %91
    %vm93 = vcmask 130112
    %94 = vst.msk [vmem:[#allocation0] sm:$0x1] %vm93, %v92
    %s96 = sshll.u32 1, 1
    %s97 = ssub.s32 %s96, 1
    %v99 = vld [vmem:[#allocation0] sm:%s97]
    %s100 = sshll.u32 1, 1
    %s101 = ssub.s32 %s100, 1
    %102 = vst [vmem:[%s1] sm:%s101] %v99

// kernel: cnn_layer_forward.3
$region0: #{cnn_layer_forward.3}
  #allocation0 [shape = 'u32[]', space=smem, size = 0x4, offset = 0x4, fixed_abs, tag = 'smem constant byte address 0x4 - core index']
  #allocation1 [shape = 'u32[144,128]{1,0:T(1,128)}', space=vmem, size = 0x12000, scoped, tag = 'internal scratch']
  %s0 = inlined_call_operand.vmem [shape: f32[2,16,128], index: 0, kind: input, shape index: {}, may-alias: {0,3}]
  %s1 = inlined_call_operand.vmem [shape: f32[1,128], index: 1, kind: input, shape index: {}]
  %s2 = inlined_call_operand.vmem [shape: f32[1,128], index: 2, kind: input, shape index: {}]
  %s3 = inlined_call_operand.vmem [shape: f32[2,16,128], index: 3, kind: output, shape index: {}, may-alias: {0,3}]
  %s4 = sld [smem:[#allocation0]]
  $region45: #{cnn_layer_forward.3} parent=0
    _
  %s6 = ssub.s32 1, %s4
  %s7 = scalar_select 0, %s6, %s4
  loop: start=0, step=1, limit=4
  $region2: #{cnn_layer_forward.3} parent=0 // loop_pre_header
    _
  $region3: #{cnn_layer_forward.3} parent=0 // loop_header
    %s9 = sphi 0, %s13
    %p10 = scmp.ge.s32.totalorder %s9, 4
    %s19 = sphi 0, %s21
    %s22 = sphi 0, %s19
    %s23 = sphi 0, %s22
    %s39 = sphi 0, %s23
    %s43 = sphi 0, %s43
    %s45 = sphi 0, %s43
    %s46 = sphi 0, %s45
    %s60 = sphi 0, %s46
    %s64 = sphi 0, %s64
    %s66 = sphi 0, %s64
    %s67 = sphi 0, %s66
    %s81 = sphi 0, %s67
    %s87 = sphi 0, %s89
    %s90 = sphi 0, %s87
    %s91 = sphi 0, %s90
    %s107 = sphi 0, %s91
  $region4: #{cnn_layer_forward.3} parent=0 // loop_header_branch
    %12 = sbr.rel (%p10) target = $region8
  $region5: #{cnn_layer_forward.3} parent=0 // loop_body
    %s14 = ssub.s32 %s9, 1
    %s15 = ssub.s32 %s9, 2
    %s16 = sadd.s32 %s9, 1
    %s17 = ssub.s32 %s9, %s16
    %p18 = scmp.eq.s32.totalorder %s17, 0
    %s20 = sadd.s32 %s19, 1
    %s21 = scalar_select %p18, %s19, %s20
    %p24 = pneg %p18
    %p25 = scmp.eq.s32.totalorder %s9, 1
    %p26 = por %p24, %p25
    %p27 = scmp.ne.s32.totalorder %s19, %s22
    %p28 = scmp.eq.s32.totalorder %s9, 0
    %p29 = por %p27, %p28
    %p30 = scmp.ne.s32.totalorder %s19, %s22
    %p31 = scmp.eq.s32.totalorder %s14, 1
    %p32 = por %p30, %p31
    %p33 = scmp.ne.s32.totalorder %s22, %s23
    %p34 = scmp.eq.s32.totalorder %s14, 0
    %p35 = por %p33, %p34
    %p36 = scmp.ne.s32.totalorder %s22, %s23
    %p37 = scmp.eq.s32.totalorder %s15, 1
    %p38 = por %p36, %p37
    %p40 = scmp.ne.s32.totalorder %s23, %s39
    %p41 = scmp.eq.s32.totalorder %s15, 0
    %p42 = por %p40, %p41
    %s44 = sadd.s32 %s43, 1
    %p47 = scmp.eq.s32.totalorder %s9, 1
    %p48 = scmp.ne.s32.totalorder %s43, %s45
    %p49 = scmp.eq.s32.totalorder %s9, 0
    %p50 = por %p48, %p49
    %p51 = scmp.ne.s32.totalorder %s43, %s45
    %p52 = scmp.eq.s32.totalorder %s14, 1
    %p53 = por %p51, %p52
    %p54 = scmp.ne.s32.totalorder %s45, %s46
    %p55 = scmp.eq.s32.totalorder %s14, 0
    %p56 = por %p54, %p55
    %p57 = scmp.ne.s32.totalorder %s45, %s46
    %p58 = scmp.eq.s32.totalorder %s15, 1
    %p59 = por %p57, %p58
    %p61 = scmp.ne.s32.totalorder %s46, %s60
    %p62 = scmp.eq.s32.totalorder %s15, 0
    %p63 = por %p61, %p62
    %s65 = sadd.s32 %s64, 1
    %p68 = scmp.eq.s32.totalorder %s9, 1
    %p69 = scmp.ne.s32.totalorder %s64, %s66
    %p70 = scmp.eq.s32.totalorder %s9, 0
    %p71 = por %p69, %p70
    %p72 = scmp.ne.s32.totalorder %s64, %s66
    %p73 = scmp.eq.s32.totalorder %s14, 1
    %p74 = por %p72, %p73
    %p75 = scmp.ne.s32.totalorder %s66, %s67
    %p76 = scmp.eq.s32.totalorder %s14, 0
    %p77 = por %p75, %p76
    %p78 = scmp.ne.s32.totalorder %s66, %s67
    %p79 = scmp.eq.s32.totalorder %s15, 1
    %p80 = por %p78, %p79
    %p82 = scmp.ne.s32.totalorder %s67, %s81
    %p83 = scmp.eq.s32.totalorder %s15, 0
    %p84 = por %p82, %p83
    %s85 = ssub.s32 %s9, %s16
    %p86 = scmp.eq.s32.totalorder %s85, 0
    %s88 = sadd.s32 %s87, 1
    %s89 = scalar_select %p86, %s87, %s88
    %p92 = pneg %p86
    %p93 = scmp.eq.s32.totalorder %s9, 1
    %p94 = por %p92, %p93
    %p95 = scmp.ne.s32.totalorder %s87, %s90
    %p96 = scmp.eq.s32.totalorder %s9, 0
    %p97 = por %p95, %p96
    %p98 = scmp.ne.s32.totalorder %s87, %s90
    %p99 = scmp.eq.s32.totalorder %s14, 1
    %p100 = por %p98, %p99
    %p101 = scmp.ne.s32.totalorder %s90, %s91
    %p102 = scmp.eq.s32.totalorder %s14, 0
    %p103 = por %p101, %p102
    %p104 = scmp.ne.s32.totalorder %s90, %s91
    %p105 = scmp.eq.s32.totalorder %s15, 1
    %p106 = por %p104, %p105
    %p108 = scmp.ne.s32.totalorder %s91, %s107
    %p109 = scmp.eq.s32.totalorder %s15, 0
    %p110 = por %p108, %p109
    %p111 = scmp.le.s32.totalorder 1, %s9
    %p112 = scmp.lt.s32.totalorder %s9, 3
    %p113 = pnand %p111, %p112
    %p114 = pneg %p113
    // Predicated region
    $region9: #{cnn_layer_forward.3} parent=5 // pred_check
      _
    $region10: #{cnn_layer_forward.3} parent=5 // pred_check_branch
      %116 = sbr.rel (%p113) target = $region12
    $region11: #{cnn_layer_forward.3} parent=5 // pred_region
      %s117 = ssub.s32 %s9, 1
      // Predicated region
      $region13: #{cnn_layer_forward.3} parent=11 // pred_check
        %p118 = pneg %p56
      $region14: #{cnn_layer_forward.3} parent=11 // pred_check_branch
        %120 = sbr.rel (%p118) target = $region16
      $region15: #{cnn_layer_forward.3} parent=11 // pred_region
        _
      $region16: #{cnn_layer_forward.3} parent=11 // pred_fallthru
        _
      // Predicated region
      $region17: #{cnn_layer_forward.3} parent=11 // pred_check
        %p121 = pneg %p77
      $region18: #{cnn_layer_forward.3} parent=11 // pred_check_branch
        %123 = sbr.rel (%p121) target = $region20
      $region19: #{cnn_layer_forward.3} parent=11 // pred_region
        _
      $region20: #{cnn_layer_forward.3} parent=11 // pred_fallthru
        _
    $region12: #{cnn_layer_forward.3} parent=5 // pred_fallthru
      _
    %p124 = scmp.lt.s32.totalorder %s9, 2
    // Predicated region
    $region21: #{cnn_layer_forward.3} parent=5 // pred_check
      %p125 = pneg %p124
    $region22: #{cnn_layer_forward.3} parent=5 // pred_check_branch
      %127 = sbr.rel (%p125) target = $region24
    $region23: #{cnn_layer_forward.3} parent=5 // pred_region
      // Predicated region
      $region25: #{cnn_layer_forward.3} parent=23 // pred_check
        %p128 = pneg %p29
      $region26: #{cnn_layer_forward.3} parent=23 // pred_check_branch
        %130 = sbr.rel (%p128) target = $region28
      $region27: #{cnn_layer_forward.3} parent=23 // pred_region
        %p131 = scmp.lt.s32.totalorder %s9, 1
        %s132 = scalar_select %p131, %s9, 1
        %s133 = smul.addr %s132, 2
        %s134 = smul.addr %s133, 8
        %s135 = scalar_lea.vmem %s0, %s134
      $region28: #{cnn_layer_forward.3} parent=23 // pred_fallthru
        _
    $region24: #{cnn_layer_forward.3} parent=5 // pred_fallthru
      _
    %p136 = scmp.le.s32.totalorder 1, %s9
    %p137 = scmp.lt.s32.totalorder %s9, 3
    %p138 = pnand %p136, %p137
    %p139 = pneg %p138
    // Predicated region
    $region29: #{cnn_layer_forward.3} parent=5 // pred_check
      _
    $region30: #{cnn_layer_forward.3} parent=5 // pred_check_branch
      %141 = sbr.rel (%p138) target = $region32
    $region31: #{cnn_layer_forward.3} parent=5 // pred_region
      %s142 = ssub.s32 %s9, 1
      %p143 = scmp.lt.s32.totalorder %s14, 1
      %s144 = scalar_select %p143, %s14, 1
      %s145 = smul.addr %s144, 2
      %s146 = smul.addr %s145, 8
      %s147 = scalar_lea.vmem %s0, %s146
      %p148 = pneg %p35
      %p149 = pneg %p32
      %p150 = pneg %p56
      %p151 = pneg %p53
      %p152 = pneg %p77
      %p153 = pneg %p74
      %p154 = pneg %p103
      %p155 = pneg %p100
      %p156 = scmp.lt.s32.totalorder %s14, 1
      %s157 = scalar_select %p156, %s14, 1
      %s158 = smul.addr %s157, 2
      %s159 = smul.addr %s158, 8
      %s160 = scalar_lea.vmem %s3, %s159
      %p161 = scmp.lt.s32.totalorder %s14, 1
      %s162 = scalar_select %p161, %s14, 1
      %s163 = smul.addr %s162, 2
      %s164 = smul.addr %s163, 8
      %s165 = scalar_lea.vmem %s0, %s164
      %p166 = scmp.lt.s32.totalorder %s14, 1
      %s167 = scalar_select %p166, %s14, 1
      %s168 = smul.addr %s167, 2
      %s169 = smul.addr %s168, 8
      %s170 = scalar_lea.vmem %s3, %s169
      %v171 = vld [vmem:[%s165] sm:$0xff]
      %v172 = vld [vmem:[%s165 + $0x8] sm:$0xff]
      %v173 = vld [vmem:[%s1] sm:$0x1]
      %v175 = vlaneseq
      %v176 = vshrl.u32 %v175, 7
      %v177 = vsub.s32 0, %v176
      %v178 = vrot.slane %v173, %v177
      %v180 = vmul.f32 %v171, %v178
      %v181 = vmul.f32 %v172, %v178
      %v182 = vld [vmem:[%s2] sm:$0x1]
      %v184 = vlaneseq
      %v185 = vshrl.u32 %v184, 7
      %v186 = vsub.s32 0, %v185
      %v187 = vrot.slane %v182, %v186
      %v189 = vadd.f32 %v180, %v187
      %v190 = vadd.f32 %v181, %v187
      %vm191 = vcmp.ge.f32.partialorder %v189, 0.0
      %vm192 = vcmp.ge.f32.partialorder %v190, 0.0
      %v193 = vmul.f32 %v189, 0.01
      %v194 = vmul.f32 %v190, 0.01
      %v195 = vsel %vm191, %v189, %v193
      %v196 = vsel %vm192, %v190, %v194
      %197 = vst [vmem:[%s170] sm:$0xff] %v195
      %198 = vst [vmem:[%s170 + $0x8] sm:$0xff] %v196
      %p199 = scmp.lt.s32.totalorder %s14, 1
      %s200 = scalar_select %p199, %s14, 1
      %s201 = smul.addr %s200, 2
      %s202 = smul.addr %s201, 8
      %s203 = scalar_lea.vmem %s3, %s202
      // Predicated region
      $region33: #{cnn_layer_forward.3} parent=31 // pred_check
        %p204 = pneg %p100
      $region34: #{cnn_layer_forward.3} parent=31 // pred_check_branch
        %206 = sbr.rel (%p204) target = $region36
      $region35: #{cnn_layer_forward.3} parent=31 // pred_region
        _
      $region36: #{cnn_layer_forward.3} parent=31 // pred_fallthru
        _
    $region32: #{cnn_layer_forward.3} parent=5 // pred_fallthru
      _
    %p207 = scmp.le.s32.totalorder 2, %s9
    // Predicated region
    $region37: #{cnn_layer_forward.3} parent=5 // pred_check
      %p208 = pneg %p207
    $region38: #{cnn_layer_forward.3} parent=5 // pred_check_branch
      %210 = sbr.rel (%p208) target = $region40
    $region39: #{cnn_layer_forward.3} parent=5 // pred_region
      %s211 = ssub.s32 %s9, 2
      // Predicated region
      $region41: #{cnn_layer_forward.3} parent=39 // pred_check
        %p212 = pneg %p106
      $region42: #{cnn_layer_forward.3} parent=39 // pred_check_branch
        %214 = sbr.rel (%p212) target = $region44
      $region43: #{cnn_layer_forward.3} parent=39 // pred_region
        %p215 = scmp.lt.s32.totalorder %s15, 1
        %s216 = scalar_select %p215, %s15, 1
        %s217 = smul.addr %s216, 2
        %s218 = smul.addr %s217, 8
        %s219 = scalar_lea.vmem %s3, %s218
      $region44: #{cnn_layer_forward.3} parent=39 // pred_fallthru
        _
    $region40: #{cnn_layer_forward.3} parent=5 // pred_fallthru
      _
  $region6: #{cnn_layer_forward.3} parent=0 // loop_footer
    %s13 = sadd.s32 1, %s9
  $region7: #{cnn_layer_forward.3} parent=0 // loop_footer_branch
    %8 = sbr.rel target = $region3
  $region8: #{cnn_layer_forward.3} parent=0 // loop_exit
    _

// kernel: cnn_layer_forward.2
$region0: #{cnn_layer_forward.2}
  #allocation0 [shape = 'u32[]', space=smem, size = 0x4, offset = 0x4, fixed_abs, tag = 'smem constant byte address 0x4 - core index']
  #allocation1 [shape = 'u32[144,128]{1,0:T(1,128)}', space=vmem, size = 0x12000, scoped, tag = 'internal scratch']
  #allocation2 [shape = 'f32[4,18,16]{2,1,0:T(8,128)}', space=vmem, size = 0xc000, scoped, tag = 'scratch operand']
  %s0 = inlined_call_operand.vmem [shape: f32[2,4,16,16], index: 0, kind: input, shape index: {}]
  %s1 = inlined_call_operand.vmem [shape: f32[4,3,16,128], index: 1, kind: input, shape index: {}]
  %s2 = inlined_call_operand.vmem [shape: f32[2,16,128], index: 2, kind: output, shape index: {0}]
  %s3 = inlined_call_operand.vmem [shape: f32[2,1,128], index: 3, kind: output, shape index: {1}]
  %s4 = inlined_call_operand.vmem [shape: f32[2,1,128], index: 4, kind: output, shape index: {2}]
  %5 = xla_tuple %s2, %s3, %s4
  %s6 = sld [smem:[#allocation0]]
  $region57: #{cnn_layer_forward.2} parent=0
    _
  %s8 = ssub.s32 1, %s6
  %s9 = scalar_select 0, %s8, %s6
  loop: start=0, step=1, limit=4
  $region2: #{cnn_layer_forward.2} parent=0 // loop_pre_header
    _
  $region3: #{cnn_layer_forward.2} parent=0 // loop_header
    %s11 = sphi 0, %s15
    %p12 = scmp.ge.s32.totalorder %s11, 4
    %s21 = sphi 0, %s23
    %s24 = sphi 0, %s21
    %s25 = sphi 0, %s24
    %s41 = sphi 0, %s25
    %s45 = sphi 0, %s45
    %s47 = sphi 0, %s45
    %s48 = sphi 0, %s47
    %s62 = sphi 0, %s48
    %s68 = sphi 0, %s70
    %s71 = sphi 0, %s68
    %s72 = sphi 0, %s71
    %s88 = sphi 0, %s72
    %s94 = sphi 0, %s96
    %s97 = sphi 0, %s94
    %s98 = sphi 0, %s97
    %s114 = sphi 0, %s98
    %s120 = sphi 0, %s122
    %s123 = sphi 0, %s120
    %s124 = sphi 0, %s123
    %s140 = sphi 0, %s124
  $region4: #{cnn_layer_forward.2} parent=0 // loop_header_branch
    %14 = sbr.rel (%p12) target = $region8
  $region5: #{cnn_layer_forward.2} parent=0 // loop_body
    %s16 = ssub.s32 %s11, 1
    %s17 = ssub.s32 %s11, 2
    %s18 = sadd.s32 %s11, 1
    %s19 = ssub.s32 %s11, %s18
    %p20 = scmp.eq.s32.totalorder %s19, 0
    %s22 = sadd.s32 %s21, 1
    %s23 = scalar_select %p20, %s21, %s22
    %p26 = pneg %p20
    %p27 = scmp.eq.s32.totalorder %s11, 1
    %p28 = por %p26, %p27
    %p29 = scmp.ne.s32.totalorder %s21, %s24
    %p30 = scmp.eq.s32.totalorder %s11, 0
    %p31 = por %p29, %p30
    %p32 = scmp.ne.s32.totalorder %s21, %s24
    %p33 = scmp.eq.s32.totalorder %s16, 1
    %p34 = por %p32, %p33
    %p35 = scmp.ne.s32.totalorder %s24, %s25
    %p36 = scmp.eq.s32.totalorder %s16, 0
    %p37 = por %p35, %p36
    %p38 = scmp.ne.s32.totalorder %s24, %s25
    %p39 = scmp.eq.s32.totalorder %s17, 1
    %p40 = por %p38, %p39
    %p42 = scmp.ne.s32.totalorder %s25, %s41
    %p43 = scmp.eq.s32.totalorder %s17, 0
    %p44 = por %p42, %p43
    %s46 = sadd.s32 %s45, 1
    %p49 = scmp.eq.s32.totalorder %s11, 1
    %p50 = scmp.ne.s32.totalorder %s45, %s47
    %p51 = scmp.eq.s32.totalorder %s11, 0
    %p52 = por %p50, %p51
    %p53 = scmp.ne.s32.totalorder %s45, %s47
    %p54 = scmp.eq.s32.totalorder %s16, 1
    %p55 = por %p53, %p54
    %p56 = scmp.ne.s32.totalorder %s47, %s48
    %p57 = scmp.eq.s32.totalorder %s16, 0
    %p58 = por %p56, %p57
    %p59 = scmp.ne.s32.totalorder %s47, %s48
    %p60 = scmp.eq.s32.totalorder %s17, 1
    %p61 = por %p59, %p60
    %p63 = scmp.ne.s32.totalorder %s48, %s62
    %p64 = scmp.eq.s32.totalorder %s17, 0
    %p65 = por %p63, %p64
    %s66 = ssub.s32 %s11, %s18
    %p67 = scmp.eq.s32.totalorder %s66, 0
    %s69 = sadd.s32 %s68, 1
    %s70 = scalar_select %p67, %s68, %s69
    %p73 = pneg %p67
    %p74 = scmp.eq.s32.totalorder %s11, 1
    %p75 = por %p73, %p74
    %p76 = scmp.ne.s32.totalorder %s68, %s71
    %p77 = scmp.eq.s32.totalorder %s11, 0
    %p78 = por %p76, %p77
    %p79 = scmp.ne.s32.totalorder %s68, %s71
    %p80 = scmp.eq.s32.totalorder %s16, 1
    %p81 = por %p79, %p80
    %p82 = scmp.ne.s32.totalorder %s71, %s72
    %p83 = scmp.eq.s32.totalorder %s16, 0
    %p84 = por %p82, %p83
    %p85 = scmp.ne.s32.totalorder %s71, %s72
    %p86 = scmp.eq.s32.totalorder %s17, 1
    %p87 = por %p85, %p86
    %p89 = scmp.ne.s32.totalorder %s72, %s88
    %p90 = scmp.eq.s32.totalorder %s17, 0
    %p91 = por %p89, %p90
    %s92 = ssub.s32 %s11, %s18
    %p93 = scmp.eq.s32.totalorder %s92, 0
    %s95 = sadd.s32 %s94, 1
    %s96 = scalar_select %p93, %s94, %s95
    %p99 = pneg %p93
    %p100 = scmp.eq.s32.totalorder %s11, 1
    %p101 = por %p99, %p100
    %p102 = scmp.ne.s32.totalorder %s94, %s97
    %p103 = scmp.eq.s32.totalorder %s11, 0
    %p104 = por %p102, %p103
    %p105 = scmp.ne.s32.totalorder %s94, %s97
    %p106 = scmp.eq.s32.totalorder %s16, 1
    %p107 = por %p105, %p106
    %p108 = scmp.ne.s32.totalorder %s97, %s98
    %p109 = scmp.eq.s32.totalorder %s16, 0
    %p110 = por %p108, %p109
    %p111 = scmp.ne.s32.totalorder %s97, %s98
    %p112 = scmp.eq.s32.totalorder %s17, 1
    %p113 = por %p111, %p112
    %p115 = scmp.ne.s32.totalorder %s98, %s114
    %p116 = scmp.eq.s32.totalorder %s17, 0
    %p117 = por %p115, %p116
    %s118 = ssub.s32 %s11, %s18
    %p119 = scmp.eq.s32.totalorder %s118, 0
    %s121 = sadd.s32 %s120, 1
    %s122 = scalar_select %p119, %s120, %s121
    %p125 = pneg %p119
    %p126 = scmp.eq.s32.totalorder %s11, 1
    %p127 = por %p125, %p126
    %p128 = scmp.ne.s32.totalorder %s120, %s123
    %p129 = scmp.eq.s32.totalorder %s11, 0
    %p130 = por %p128, %p129
    %p131 = scmp.ne.s32.totalorder %s120, %s123
    %p132 = scmp.eq.s32.totalorder %s16, 1
    %p133 = por %p131, %p132
    %p134 = scmp.ne.s32.totalorder %s123, %s124
    %p135 = scmp.eq.s32.totalorder %s16, 0
    %p136 = por %p134, %p135
    %p137 = scmp.ne.s32.totalorder %s123, %s124
    %p138 = scmp.eq.s32.totalorder %s17, 1
    %p139 = por %p137, %p138
    %p141 = scmp.ne.s32.totalorder %s124, %s140
    %p142 = scmp.eq.s32.totalorder %s17, 0
    %p143 = por %p141, %p142
    %p144 = scmp.le.s32.totalorder 1, %s11
    %p145 = scmp.lt.s32.totalorder %s11, 3
    %p146 = pnand %p144, %p145
    %p147 = pneg %p146
    // Predicated region
    $region9: #{cnn_layer_forward.2} parent=5 // pred_check
      _
    $region10: #{cnn_layer_forward.2} parent=5 // pred_check_branch
      %149 = sbr.rel (%p146) target = $region12
    $region11: #{cnn_layer_forward.2} parent=5 // pred_region
      %s150 = ssub.s32 %s11, 1
      // Predicated region
      $region13: #{cnn_layer_forward.2} parent=11 // pred_check
        %p151 = pneg %p58
      $region14: #{cnn_layer_forward.2} parent=11 // pred_check_branch
        %153 = sbr.rel (%p151) target = $region16
      $region15: #{cnn_layer_forward.2} parent=11 // pred_region
        _
      $region16: #{cnn_layer_forward.2} parent=11 // pred_fallthru
        _
    $region12: #{cnn_layer_forward.2} parent=5 // pred_fallthru
      _
    %p154 = scmp.lt.s32.totalorder %s11, 2
    // Predicated region
    $region17: #{cnn_layer_forward.2} parent=5 // pred_check
      %p155 = pneg %p154
    $region18: #{cnn_layer_forward.2} parent=5 // pred_check_branch
      %157 = sbr.rel (%p155) target = $region20
    $region19: #{cnn_layer_forward.2} parent=5 // pred_region
      // Predicated region
      $region21: #{cnn_layer_forward.2} parent=19 // pred_check
        %p158 = pneg %p31
      $region22: #{cnn_layer_forward.2} parent=19 // pred_check_branch
        %160 = sbr.rel (%p158) target = $region24
      $region23: #{cnn_layer_forward.2} parent=19 // pred_region
        %p161 = scmp.lt.s32.totalorder %s11, 1
        %s162 = scalar_select %p161, %s11, 1
        %s163 = smul.addr %s162, 8
        %s164 = smul.addr %s163, 8
        %s165 = scalar_lea.vmem %s0, %s164
      $region24: #{cnn_layer_forward.2} parent=19 // pred_fallthru
        _
    $region20: #{cnn_layer_forward.2} parent=5 // pred_fallthru
      _
    %p166 = scmp.le.s32.totalorder 1, %s11
    %p167 = scmp.lt.s32.totalorder %s11, 3
    %p168 = pnand %p166, %p167
    %p169 = pneg %p168
    // Predicated region
    $region25: #{cnn_layer_forward.2} parent=5 // pred_check
      _
    $region26: #{cnn_layer_forward.2} parent=5 // pred_check_branch
      %171 = sbr.rel (%p168) target = $region28
    $region27: #{cnn_layer_forward.2} parent=5 // pred_region
      %s172 = ssub.s32 %s11, 1
      %p173 = scmp.lt.s32.totalorder %s16, 1
      %s174 = scalar_select %p173, %s16, 1
      %s175 = smul.addr %s174, 8
      %s176 = smul.addr %s175, 8
      %s177 = scalar_lea.vmem %s0, %s176
      %p178 = pneg %p37
      %p179 = pneg %p34
      %p180 = pneg %p58
      %p181 = pneg %p55
      %p182 = pneg %p84
      %p183 = pneg %p81
      %p184 = scmp.lt.s32.totalorder %s16, 1
      %s185 = scalar_select %p184, %s16, 1
      %s186 = smul.addr %s185, 2
      %s187 = smul.addr %s186, 8
      %s188 = scalar_lea.vmem %s2, %s187
      %p189 = pneg %p110
      %p190 = pneg %p107
      %p191 = scmp.lt.s32.totalorder %s16, 1
      %s192 = scalar_select %p191, %s16, 1
      %s193 = scalar_lea.vmem %s3, %s192
      %p194 = pneg %p136
      %p195 = pneg %p133
      %p196 = scmp.lt.s32.totalorder %s16, 1
      %s197 = scalar_select %p196, %s16, 1
      %s198 = scalar_lea.vmem %s4, %s197
      %p199 = scmp.lt.s32.totalorder %s16, 1
      %s200 = scalar_select %p199, %s16, 1
      %s201 = smul.addr %s200, 8
      %s202 = smul.addr %s201, 8
      %s203 = scalar_lea.vmem %s0, %s202
      %p204 = scmp.lt.s32.totalorder %s16, 1
      %s205 = scalar_select %p204, %s16, 1
      %s206 = smul.addr %s205, 2
      %s207 = smul.addr %s206, 8
      %s208 = scalar_lea.vmem %s2, %s207
      %p209 = scmp.lt.s32.totalorder %s16, 1
      %s210 = scalar_select %p209, %s16, 1
      %s211 = scalar_lea.vmem %s3, %s210
      %p212 = scmp.lt.s32.totalorder %s16, 1
      %s213 = scalar_select %p212, %s16, 1
      %s214 = scalar_lea.vmem %s4, %s213
      %vm215 = vcmask 122880
      %216 = vst.msk [vmem:[#allocation2] sm:$0x1] %vm215, 0.0
      %217 = vst.msk [vmem:[#allocation2 + $0x18] sm:$0x1] %vm215, 0.0
      %218 = vst.msk [vmem:[#allocation2 + $0x30] sm:$0x1] %vm215, 0.0
      %219 = vst.msk [vmem:[#allocation2 + $0x48] sm:$0x1] %vm215, 0.0
      %220 = vst.msk [vmem:[#allocation2 + $0x11] sm:$0x1] %vm215, 0.0
      %221 = vst.msk [vmem:[#allocation2 + $0x29] sm:$0x1] %vm215, 0.0
      %222 = vst.msk [vmem:[#allocation2 + $0x41] sm:$0x1] %vm215, 0.0
      %223 = vst.msk [vmem:[#allocation2 + $0x59] sm:$0x1] %vm215, 0.0
      %v224 = vld [vmem:[%s203] sm:$0xff]
      %v225 = vld [vmem:[%s203 + $0x8] sm:$0xff]
      %v226 = vld [vmem:[%s203 + $0x10] sm:$0xff]
      %v227 = vld [vmem:[%s203 + $0x18] sm:$0xff]
      %v228 = vld [vmem:[%s203 + $0x20] sm:$0xff]
      %v229 = vld [vmem:[%s203 + $0x28] sm:$0xff]
      %v230 = vld [vmem:[%s203 + $0x30] sm:$0xff]
      %v231 = vld [vmem:[%s203 + $0x38] sm:$0xff]
      %vm232 = vcmask 130048
      %233 = vst.msk [vmem:[#allocation2 + $0x1] sm:$0xff] %vm232, %v224
      %234 = vst.msk [vmem:[#allocation2 + $0x9] sm:$0xff] %vm232, %v225
      %235 = vst.msk [vmem:[#allocation2 + $0x19] sm:$0xff] %vm232, %v226
      %236 = vst.msk [vmem:[#allocation2 + $0x21] sm:$0xff] %vm232, %v227
      %237 = vst.msk [vmem:[#allocation2 + $0x31] sm:$0xff] %vm232, %v228
      %238 = vst.msk [vmem:[#allocation2 + $0x39] sm:$0xff] %vm232, %v229
      %239 = vst.msk [vmem:[#allocation2 + $0x49] sm:$0xff] %vm232, %v230
      %240 = vst.msk [vmem:[#allocation2 + $0x51] sm:$0xff] %vm232, %v231
      %v241 = vld [vmem:[#allocation2] sm:$0xff]
      %v242 = vld [vmem:[#allocation2 + $0x8] sm:$0xff]
      %v243 = vld [vmem:[%s1] sm:$0xff]
      %v244 = vld [vmem:[%s1 + $0x8] sm:$0xff]
      %v245 = vld [vmem:[#allocation2 + $0x1] sm:$0xff]
      %v246 = vld [vmem:[#allocation2 + $0x9] sm:$0xff]
      %s247 = scalar_lea.vmem %s1, 16
      %v248 = vld [vmem:[%s247] sm:$0xff]
      %v249 = vld [vmem:[%s247 + $0x8] sm:$0xff]
      %v251 = vsel %vm232, %v245, 0
      %v254 = vsel %vm232, %v246, 0
      %256 = vmatprep.subr.mxu0 0.0
      %257 = vmatpush1.msra.mxu0 0.0
      %258 = vmatprep.subr.mxu0 0.0
      %259 = vmatpush1.msra.mxu0 0.0
      %260 = vmatprep.subr.mxu0 0.0
      %261 = vmatpush1.msra.mxu0 0.0
      %262 = vmatprep.subr.mxu0 0.0
      %263 = vmatpush1.msra.mxu0 0.0
      %264 = vmatprep.subr.mxu0 0.0
      %265 = vmatpush1.msra.mxu0 0.0
      %266 = vmatprep.subr.mxu0 0.0
      %267 = vmatpush1.msra.mxu0 0.0
      %268 = vmatprep.subr.mxu0 0.0
      %269 = vmatpush1.msra.mxu0 0.0
      %270 = vmatprep.subr.mxu0 0.0
      %271 = vmatpush1.msra.mxu0 0.0
      %272 = vmatprep.subr.mxu0 0.0
      %273 = vmatpush1.msra.mxu0 0.0
      %274 = vmatprep.subr.mxu0 0.0
      %275 = vmatpush1.msra.mxu0 0.0
      %276 = vmatprep.subr.mxu0 0.0
      %277 = vmatpush1.msra.mxu0 0.0
      %278 = vmatprep.subr.mxu0 0.0
      %279 = vmatpush1.msra.mxu0 0.0
      %280 = vmatprep.subr.mxu0 0.0
      %281 = vmatpush1.msra.mxu0 0.0
      %282 = vmatprep.subr.mxu0 0.0
      %283 = vmatpush1.msra.mxu0 0.0
      %284 = vmatprep.subr.mxu0 0.0
      %285 = vmatpush1.msra.mxu0 %v249
      %286 = vmatprep.subr.mxu0 0.0
      %287 = vmatpush1.msra.mxu0 %v248
      %288 = vmatprep.subr.mxu0 0.0
      %289 = vmatpush2.msra.mxu0 0.0
      %290 = vmatprep.subr.mxu0 0.0
      %291 = vmatpush2.msra.mxu0 0.0
      %292 = vmatprep.subr.mxu0 0.0
      %293 = vmatpush2.msra.mxu0 0.0
      %294 = vmatprep.subr.mxu0 0.0
      %295 = vmatpush2.msra.mxu0 0.0
      %296 = vmatprep.subr.mxu0 0.0
      %297 = vmatpush2.msra.mxu0 0.0
      %298 = vmatprep.subr.mxu0 0.0
      %299 = vmatpush2.msra.mxu0 0.0
      %300 = vmatprep.subr.mxu0 0.0
      %301 = vmatpush2.msra.mxu0 0.0
      %302 = vmatprep.subr.mxu0 0.0
      %303 = vmatpush2.msra.mxu0 0.0
      %304 = vmatprep.subr.mxu0 0.0
      %305 = vmatpush2.msra.mxu0 0.0
      %306 = vmatprep.subr.mxu0 0.0
      %307 = vmatpush2.msra.mxu0 0.0
      %308 = vmatprep.subr.mxu0 0.0
      %309 = vmatpush2.msra.mxu0 0.0
      %310 = vmatprep.subr.mxu0 0.0
      %311 = vmatpush2.msra.mxu0 0.0
      %312 = vmatprep.subr.mxu0 0.0
      %313 = vmatpush2.msra.mxu0 0.0
      %314 = vmatprep.subr.mxu0 0.0
      %315 = vmatpush2.msra.mxu0 0.0
      %316 = vmatprep.subr.mxu0 0.0
      %317 = vmatpush2.msra.mxu0 0.0
      %318 = vmatprep.subr.mxu0 0.0
      %319 = vmatpush2.msra.mxu0 0.0
      %320 = vmatprep.mubr.f32.mxu0 0.0
      %321 = vmatmul.mubr.f32.gmra.mxu0 %v251
      %v322 = vpop.f32.mrf.mxu0
      %v323 = vadd.f32 0.0, %v322
      %v324 = vpop.f32.mrf.mxu0
      %325 = vmatprep.mubr.f32.mxu0 0.0
      %326 = vmatmul.mubr.f32.gmra.mxu0 %v254
      %v327 = vpop.f32.mrf.mxu0
      %v328 = vadd.f32 0.0, %v327
      %v329 = vpop.f32.mrf.mxu0
      %330 = vdwg.mxu0
      %v332 = vsel %vm232, %v241, 0
      %v335 = vsel %vm232, %v242, 0
      %337 = vmatprep.subr.mxu0 0.0
      %338 = vmatpush1.msra.mxu0 0.0
      %339 = vmatprep.subr.mxu0 0.0
      %340 = vmatpush1.msra.mxu0 0.0
      %341 = vmatprep.subr.mxu0 0.0
      %342 = vmatpush1.msra.mxu0 0.0
      %343 = vmatprep.subr.mxu0 0.0
      %344 = vmatpush1.msra.mxu0 0.0
      %345 = vmatprep.subr.mxu0 0.0
      %346 = vmatpush1.msra.mxu0 0.0
      %347 = vmatprep.subr.mxu0 0.0
      %348 = vmatpush1.msra.mxu0 0.0
      %349 = vmatprep.subr.mxu0 0.0
      %350 = vmatpush1.msra.mxu0 0.0
      %351 = vmatprep.subr.mxu0 0.0
      %352 = vmatpush1.msra.mxu0 0.0
      %353 = vmatprep.subr.mxu0 0.0
      %354 = vmatpush1.msra.mxu0 0.0
      %355 = vmatprep.subr.mxu0 0.0
      %356 = vmatpush1.msra.mxu0 0.0
      %357 = vmatprep.subr.mxu0 0.0
      %358 = vmatpush1.msra.mxu0 0.0
      %359 = vmatprep.subr.mxu0 0.0
      %360 = vmatpush1.msra.mxu0 0.0
      %361 = vmatprep.subr.mxu0 0.0
      %362 = vmatpush1.msra.mxu0 0.0
      %363 = vmatprep.subr.mxu0 0.0
      %364 = vmatpush1.msra.mxu0 0.0
      %365 = vmatprep.subr.mxu0 0.0
      %366 = vmatpush1.msra.mxu0 %v244
      %367 = vmatprep.subr.mxu0 0.0
      %368 = vmatpush1.msra.mxu0 %v243
      %369 = vmatprep.subr.mxu0 0.0
      %370 = vmatpush2.msra.mxu0 0.0
      %371 = vmatprep.subr.mxu0 0.0
      %372 = vmatpush2.msra.mxu0 0.0
      %373 = vmatprep.subr.mxu0 0.0
      %374 = vmatpush2.msra.mxu0 0.0
      %375 = vmatprep.subr.mxu0 0.0
      %376 = vmatpush2.msra.mxu0 0.0
      %377 = vmatprep.subr.mxu0 0.0
      %378 = vmatpush2.msra.mxu0 0.0
      %379 = vmatprep.subr.mxu0 0.0
      %380 = vmatpush2.msra.mxu0 0.0
      %381 = vmatprep.subr.mxu0 0.0
      %382 = vmatpush2.msra.mxu0 0.0
      %383 = vmatprep.subr.mxu0 0.0
      %384 = vmatpush2.msra.mxu0 0.0
      %385 = vmatprep.subr.mxu0 0.0
      %386 = vmatpush2.msra.mxu0 0.0
      %387 = vmatprep.subr.mxu0 0.0
      %388 = vmatpush2.msra.mxu0 0.0
      %389 = vmatprep.subr.mxu0 0.0
      %390 = vmatpush2.msra.mxu0 0.0
      %391 = vmatprep.subr.mxu0 0.0
      %392 = vmatpush2.msra.mxu0 0.0
      %393 = vmatprep.subr.mxu0 0.0
      %394 = vmatpush2.msra.mxu0 0.0
      %395 = vmatprep.subr.mxu0 0.0
      %396 = vmatpush2.msra.mxu0 0.0
      %397 = vmatprep.subr.mxu0 0.0
      %398 = vmatpush2.msra.mxu0 0.0
      %399 = vmatprep.subr.mxu0 0.0
      %400 = vmatpush2.msra.mxu0 0.0
      %401 = vmatprep.mubr.f32.mxu0 0.0
      %402 = vmatmul.mubr.f32.gmra.mxu0 %v332
      %v403 = vpop.f32.mrf.mxu0
      %v404 = vadd.f32 %v323, %v403
      %v405 = vpop.f32.mrf.mxu0
      %406 = vmatprep.mubr.f32.mxu0 0.0
      %407 = vmatmul.mubr.f32.gmra.mxu0 %v335
      %v408 = vpop.f32.mrf.mxu0
      %v409 = vadd.f32 %v328, %v408
      %v410 = vpop.f32.mrf.mxu0
      %411 = vdwg.mxu0
      %v412 = vld [vmem:[#allocation2 + $0x2] sm:$0xff]
      %v413 = vld [vmem:[#allocation2 + $0xa] sm:$0xff]
      %s414 = scalar_lea.vmem %s1, 32
      %v415 = vld [vmem:[%s414] sm:$0xff]
      %v416 = vld [vmem:[%s414 + $0x8] sm:$0xff]
      %v418 = vsel %vm232, %v412, 0
      %v421 = vsel %vm232, %v413, 0
      %423 = vmatprep.subr.mxu0 0.0
      %424 = vmatpush1.msra.mxu0 0.0
      %425 = vmatprep.subr.mxu0 0.0
      %426 = vmatpush1.msra.mxu0 0.0
      %427 = vmatprep.subr.mxu0 0.0
      %428 = vmatpush1.msra.mxu0 0.0
      %429 = vmatprep.subr.mxu0 0.0
      %430 = vmatpush1.msra.mxu0 0.0
      %431 = vmatprep.subr.mxu0 0.0
      %432 = vmatpush1.msra.mxu0 0.0
      %433 = vmatprep.subr.mxu0 0.0
      %434 = vmatpush1.msra.mxu0 0.0
      %435 = vmatprep.subr.mxu0 0.0
      %436 = vmatpush1.msra.mxu0 0.0
      %437 = vmatprep.subr.mxu0 0.0
      %438 = vmatpush1.msra.mxu0 0.0
      %439 = vmatprep.subr.mxu0 0.0
      %440 = vmatpush1.msra.mxu0 0.0
      %441 = vmatprep.subr.mxu0 0.0
      %442 = vmatpush1.msra.mxu0 0.0
      %443 = vmatprep.subr.mxu0 0.0
      %444 = vmatpush1.msra.mxu0 0.0
      %445 = vmatprep.subr.mxu0 0.0
      %446 = vmatpush1.msra.mxu0 0.0
      %447 = vmatprep.subr.mxu0 0.0
      %448 = vmatpush1.msra.mxu0 0.0
      %449 = vmatprep.subr.mxu0 0.0
      %450 = vmatpush1.msra.mxu0 0.0
      %451 = vmatprep.subr.mxu0 0.0
      %452 = vmatpush1.msra.mxu0 %v416
      %453 = vmatprep.subr.mxu0 0.0
      %454 = vmatpush1.msra.mxu0 %v415
      %455 = vmatprep.subr.mxu0 0.0
      %456 = vmatpush2.msra.mxu0 0.0
      %457 = vmatprep.subr.mxu0 0.0
      %458 = vmatpush2.msra.mxu0 0.0
      %459 = vmatprep.subr.mxu0 0.0
      %460 = vmatpush2.msra.mxu0 0.0
      %461 = vmatprep.subr.mxu0 0.0
      %462 = vmatpush2.msra.mxu0 0.0
      %463 = vmatprep.subr.mxu0 0.0
      %464 = vmatpush2.msra.mxu0 0.0
      %465 = vmatprep.subr.mxu0 0.0
      %466 = vmatpush2.msra.mxu0 0.0
      %467 = vmatprep.subr.mxu0 0.0
      %468 = vmatpush2.msra.mxu0 0.0
      %469 = vmatprep.subr.mxu0 0.0
      %470 = vmatpush2.msra.mxu0 0.0
      %471 = vmatprep.subr.mxu0 0.0
      %472 = vmatpush2.msra.mxu0 0.0
      %473 = vmatprep.subr.mxu0 0.0
      %474 = vmatpush2.msra.mxu0 0.0
      %475 = vmatprep.subr.mxu0 0.0
      %476 = vmatpush2.msra.mxu0 0.0
      %477 = vmatprep.subr.mxu0 0.0
      %478 = vmatpush2.msra.mxu0 0.0
      %479 = vmatprep.subr.mxu0 0.0
      %480 = vmatpush2.msra.mxu0 0.0
      %481 = vmatprep.subr.mxu0 0.0
      %482 = vmatpush2.msra.mxu0 0.0
      %483 = vmatprep.subr.mxu0 0.0
      %484 = vmatpush2.msra.mxu0 0.0
      %485 = vmatprep.subr.mxu0 0.0
      %486 = vmatpush2.msra.mxu0 0.0
      %487 = vmatprep.mubr.f32.mxu0 0.0
      %488 = vmatmul.mubr.f32.gmra.mxu0 %v418
      %v489 = vpop.f32.mrf.mxu0
      %v490 = vadd.f32 0.0, %v489
      %v491 = vpop.f32.mrf.mxu0
      %492 = vmatprep.mubr.f32.mxu0 0.0
      %493 = vmatmul.mubr.f32.gmra.mxu0 %v421
      %v494 = vpop.f32.mrf.mxu0
      %v495 = vadd.f32 0.0, %v494
      %v496 = vpop.f32.mrf.mxu0
      %497 = vdwg.mxu0
      %v498 = vadd.f32 %v404, %v490
      %v499 = vadd.f32 %v409, %v495
      %s500 = scalar_lea.vmem [#allocation2], 24
      %v501 = vld [vmem:[%s500] sm:$0xff]
      %v502 = vld [vmem:[%s500 + $0x8] sm:$0xff]
      %s503 = scalar_lea.vmem %s1, 48
      %v504 = vld [vmem:[%s503] sm:$0xff]
      %v505 = vld [vmem:[%s503 + $0x8] sm:$0xff]
      %v507 = vsel %vm232, %v501, 0
      %v510 = vsel %vm232, %v502, 0
      %512 = vmatprep.subr.mxu0 0.0
      %513 = vmatpush1.msra.mxu0 0.0
      %514 = vmatprep.subr.mxu0 0.0
      %515 = vmatpush1.msra.mxu0 0.0
      %516 = vmatprep.subr.mxu0 0.0
      %517 = vmatpush1.msra.mxu0 0.0
      %518 = vmatprep.subr.mxu0 0.0
      %519 = vmatpush1.msra.mxu0 0.0
      %520 = vmatprep.subr.mxu0 0.0
      %521 = vmatpush1.msra.mxu0 0.0
      %522 = vmatprep.subr.mxu0 0.0
      %523 = vmatpush1.msra.mxu0 0.0
      %524 = vmatprep.subr.mxu0 0.0
      %525 = vmatpush1.msra.mxu0 0.0
      %526 = vmatprep.subr.mxu0 0.0
      %527 = vmatpush1.msra.mxu0 0.0
      %528 = vmatprep.subr.mxu0 0.0
      %529 = vmatpush1.msra.mxu0 0.0
      %530 = vmatprep.subr.mxu0 0.0
      %531 = vmatpush1.msra.mxu0 0.0
      %532 = vmatprep.subr.mxu0 0.0
      %533 = vmatpush1.msra.mxu0 0.0
      %534 = vmatprep.subr.mxu0 0.0
      %535 = vmatpush1.msra.mxu0 0.0
      %536 = vmatprep.subr.mxu0 0.0
      %537 = vmatpush1.msra.mxu0 0.0
      %538 = vmatprep.subr.mxu0 0.0
      %539 = vmatpush1.msra.mxu0 0.0
      %540 = vmatprep.subr.mxu0 0.0
      %541 = vmatpush1.msra.mxu0 %v505
      %542 = vmatprep.subr.mxu0 0.0
      %543 = vmatpush1.msra.mxu0 %v504
      %544 = vmatprep.subr.mxu0 0.0
      %545 = vmatpush2.msra.mxu0 0.0
      %546 = vmatprep.subr.mxu0 0.0
      %547 = vmatpush2.msra.mxu0 0.0
      %548 = vmatprep.subr.mxu0 0.0
      %549 = vmatpush2.msra.mxu0 0.0
      %550 = vmatprep.subr.mxu0 0.0
      %551 = vmatpush2.msra.mxu0 0.0
      %552 = vmatprep.subr.mxu0 0.0
      %553 = vmatpush2.msra.mxu0 0.0
      %554 = vmatprep.subr.mxu0 0.0
      %555 = vmatpush2.msra.mxu0 0.0
      %556 = vmatprep.subr.mxu0 0.0
      %557 = vmatpush2.msra.mxu0 0.0
      %558 = vmatprep.subr.mxu0 0.0
      %559 = vmatpush2.msra.mxu0 0.0
      %560 = vmatprep.subr.mxu0 0.0
      %561 = vmatpush2.msra.mxu0 0.0
      %562 = vmatprep.subr.mxu0 0.0
      %563 = vmatpush2.msra.mxu0 0.0
      %564 = vmatprep.subr.mxu0 0.0
      %565 = vmatpush2.msra.mxu0 0.0
      %566 = vmatprep.subr.mxu0 0.0
      %567 = vmatpush2.msra.mxu0 0.0
      %568 = vmatprep.subr.mxu0 0.0
      %569 = vmatpush2.msra.mxu0 0.0
      %570 = vmatprep.subr.mxu0 0.0
      %571 = vmatpush2.msra.mxu0 0.0
      %572 = vmatprep.subr.mxu0 0.0
      %573 = vmatpush2.msra.mxu0 0.0
      %574 = vmatprep.subr.mxu0 0.0
      %575 = vmatpush2.msra.mxu0 0.0
      %576 = vmatprep.mubr.f32.mxu0 0.0
      %577 = vmatmul.mubr.f32.gmra.mxu0 %v507
      %v578 = vpop.f32.mrf.mxu0
      %v579 = vadd.f32 0.0, %v578
      %v580 = vpop.f32.mrf.mxu0
      %581 = vmatprep.mubr.f32.mxu0 0.0
      %582 = vmatmul.mubr.f32.gmra.mxu0 %v510
      %v583 = vpop.f32.mrf.mxu0
      %v584 = vadd.f32 0.0, %v583
      %v585 = vpop.f32.mrf.mxu0
      %586 = vdwg.mxu0
      %v587 = vadd.f32 %v498, %v579
      %v588 = vadd.f32 %v499, %v584
      %v589 = vld [vmem:[%s500 + $0x1] sm:$0xff]
      %v590 = vld [vmem:[%s500 + $0x9] sm:$0xff]
      %s591 = scalar_lea.vmem %s1, 64
      %v592 = vld [vmem:[%s591] sm:$0xff]
      %v593 = vld [vmem:[%s591 + $0x8] sm:$0xff]
      %v595 = vsel %vm232, %v589, 0
      %v598 = vsel %vm232, %v590, 0
      %600 = vmatprep.subr.mxu0 0.0
      %601 = vmatpush1.msra.mxu0 0.0
      %602 = vmatprep.subr.mxu0 0.0
      %603 = vmatpush1.msra.mxu0 0.0
      %604 = vmatprep.subr.mxu0 0.0
      %605 = vmatpush1.msra.mxu0 0.0
      %606 = vmatprep.subr.mxu0 0.0
      %607 = vmatpush1.msra.mxu0 0.0
      %608 = vmatprep.subr.mxu0 0.0
      %609 = vmatpush1.msra.mxu0 0.0
      %610 = vmatprep.subr.mxu0 0.0
      %611 = vmatpush1.msra.mxu0 0.0
      %612 = vmatprep.subr.mxu0 0.0
      %613 = vmatpush1.msra.mxu0 0.0
      %614 = vmatprep.subr.mxu0 0.0
      %615 = vmatpush1.msra.mxu0 0.0
      %616 = vmatprep.subr.mxu0 0.0
      %617 = vmatpush1.msra.mxu0 0.0
      %618 = vmatprep.subr.mxu0 0.0
      %619 = vmatpush1.msra.mxu0 0.0
      %620 = vmatprep.subr.mxu0 0.0
      %621 = vmatpush1.msra.mxu0 0.0
      %622 = vmatprep.subr.mxu0 0.0
      %623 = vmatpush1.msra.mxu0 0.0
      %624 = vmatprep.subr.mxu0 0.0
      %625 = vmatpush1.msra.mxu0 0.0
      %626 = vmatprep.subr.mxu0 0.0
      %627 = vmatpush1.msra.mxu0 0.0
      %628 = vmatprep.subr.mxu0 0.0
      %629 = vmatpush1.msra.mxu0 %v593
      %630 = vmatprep.subr.mxu0 0.0
      %631 = vmatpush1.msra.mxu0 %v592
      %632 = vmatprep.subr.mxu0 0.0
      %633 = vmatpush2.msra.mxu0 0.0
      %634 = vmatprep.subr.mxu0 0.0
      %635 = vmatpush2.msra.mxu0 0.0
      %636 = vmatprep.subr.mxu0 0.0
      %637 = vmatpush2.msra.mxu0 0.0
      %638 = vmatprep.subr.mxu0 0.0
      %639 = vmatpush2.msra.mxu0 0.0
      %640 = vmatprep.subr.mxu0 0.0
      %641 = vmatpush2.msra.mxu0 0.0
      %642 = vmatprep.subr.mxu0 0.0
      %643 = vmatpush2.msra.mxu0 0.0
      %644 = vmatprep.subr.mxu0 0.0
      %645 = vmatpush2.msra.mxu0 0.0
      %646 = vmatprep.subr.mxu0 0.0
      %647 = vmatpush2.msra.mxu0 0.0
      %648 = vmatprep.subr.mxu0 0.0
      %649 = vmatpush2.msra.mxu0 0.0
      %650 = vmatprep.subr.mxu0 0.0
      %651 = vmatpush2.msra.mxu0 0.0
      %652 = vmatprep.subr.mxu0 0.0
      %653 = vmatpush2.msra.mxu0 0.0
      %654 = vmatprep.subr.mxu0 0.0
      %655 = vmatpush2.msra.mxu0 0.0
      %656 = vmatprep.subr.mxu0 0.0
      %657 = vmatpush2.msra.mxu0 0.0
      %658 = vmatprep.subr.mxu0 0.0
      %659 = vmatpush2.msra.mxu0 0.0
      %660 = vmatprep.subr.mxu0 0.0
      %661 = vmatpush2.msra.mxu0 0.0
      %662 = vmatprep.subr.mxu0 0.0
      %663 = vmatpush2.msra.mxu0 0.0
      %664 = vmatprep.mubr.f32.mxu0 0.0
      %665 = vmatmul.mubr.f32.gmra.mxu0 %v595
      %v666 = vpop.f32.mrf.mxu0
      %v667 = vadd.f32 0.0, %v666
      %v668 = vpop.f32.mrf.mxu0
      %669 = vmatprep.mubr.f32.mxu0 0.0
      %670 = vmatmul.mubr.f32.gmra.mxu0 %v598
      %v671 = vpop.f32.mrf.mxu0
      %v672 = vadd.f32 0.0, %v671
      %v673 = vpop.f32.mrf.mxu0
      %674 = vdwg.mxu0
      %v675 = vadd.f32 %v587, %v667
      %v676 = vadd.f32 %v588, %v672
      %v677 = vld [vmem:[%s500 + $0x2] sm:$0xff]
      %v678 = vld [vmem:[%s500 + $0xa] sm:$0xff]
      %s679 = scalar_lea.vmem %s1, 80
      %v680 = vld [vmem:[%s679] sm:$0xff]
      %v681 = vld [vmem:[%s679 + $0x8] sm:$0xff]
      %v683 = vsel %vm232, %v677, 0
      %v686 = vsel %vm232, %v678, 0
      %688 = vmatprep.subr.mxu0 0.0
      %689 = vmatpush1.msra.mxu0 0.0
      %690 = vmatprep.subr.mxu0 0.0
      %691 = vmatpush1.msra.mxu0 0.0
      %692 = vmatprep.subr.mxu0 0.0
      %693 = vmatpush1.msra.mxu0 0.0
      %694 = vmatprep.subr.mxu0 0.0
      %695 = vmatpush1.msra.mxu0 0.0
      %696 = vmatprep.subr.mxu0 0.0
      %697 = vmatpush1.msra.mxu0 0.0
      %698 = vmatprep.subr.mxu0 0.0
      %699 = vmatpush1.msra.mxu0 0.0
      %700 = vmatprep.subr.mxu0 0.0
      %701 = vmatpush1.msra.mxu0 0.0
      %702 = vmatprep.subr.mxu0 0.0
      %703 = vmatpush1.msra.mxu0 0.0
      %704 = vmatprep.subr.mxu0 0.0
      %705 = vmatpush1.msra.mxu0 0.0
      %706 = vmatprep.subr.mxu0 0.0
      %707 = vmatpush1.msra.mxu0 0.0
      %708 = vmatprep.subr.mxu0 0.0
      %709 = vmatpush1.msra.mxu0 0.0
      %710 = vmatprep.subr.mxu0 0.0
      %711 = vmatpush1.msra.mxu0 0.0
      %712 = vmatprep.subr.mxu0 0.0
      %713 = vmatpush1.msra.mxu0 0.0
      %714 = vmatprep.subr.mxu0 0.0
      %715 = vmatpush1.msra.mxu0 0.0
      %716 = vmatprep.subr.mxu0 0.0
      %717 = vmatpush1.msra.mxu0 %v681
      %718 = vmatprep.subr.mxu0 0.0
      %719 = vmatpush1.msra.mxu0 %v680
      %720 = vmatprep.subr.mxu0 0.0
      %721 = vmatpush2.msra.mxu0 0.0
      %722 = vmatprep.subr.mxu0 0.0
      %723 = vmatpush2.msra.mxu0 0.0
      %724 = vmatprep.subr.mxu0 0.0
      %725 = vmatpush2.msra.mxu0 0.0
      %726 = vmatprep.subr.mxu0 0.0
      %727 = vmatpush2.msra.mxu0 0.0
      %728 = vmatprep.subr.mxu0 0.0
      %729 = vmatpush2.msra.mxu0 0.0
      %730 = vmatprep.subr.mxu0 0.0
      %731 = vmatpush2.msra.mxu0 0.0
      %732 = vmatprep.subr.mxu0 0.0
      %733 = vmatpush2.msra.mxu0 0.0
      %734 = vmatprep.subr.mxu0 0.0
      %735 = vmatpush2.msra.mxu0 0.0
      %736 = vmatprep.subr.mxu0 0.0
      %737 = vmatpush2.msra.mxu0 0.0
      %738 = vmatprep.subr.mxu0 0.0
      %739 = vmatpush2.msra.mxu0 0.0
      %740 = vmatprep.subr.mxu0 0.0
      %741 = vmatpush2.msra.mxu0 0.0
      %742 = vmatprep.subr.mxu0 0.0
      %743 = vmatpush2.msra.mxu0 0.0
      %744 = vmatprep.subr.mxu0 0.0
      %745 = vmatpush2.msra.mxu0 0.0
      %746 = vmatprep.subr.mxu0 0.0
      %747 = vmatpush2.msra.mxu0 0.0
      %748 = vmatprep.subr.mxu0 0.0
      %749 = vmatpush2.msra.mxu0 0.0
      %750 = vmatprep.subr.mxu0 0.0
      %751 = vmatpush2.msra.mxu0 0.0
      %752 = vmatprep.mubr.f32.mxu0 0.0
      %753 = vmatmul.mubr.f32.gmra.mxu0 %v683
      %v754 = vpop.f32.mrf.mxu0
      %v755 = vadd.f32 0.0, %v754
      %v756 = vpop.f32.mrf.mxu0
      %757 = vmatprep.mubr.f32.mxu0 0.0
      %758 = vmatmul.mubr.f32.gmra.mxu0 %v686
      %v759 = vpop.f32.mrf.mxu0
      %v760 = vadd.f32 0.0, %v759
      %v761 = vpop.f32.mrf.mxu0
      %762 = vdwg.mxu0
      %v763 = vadd.f32 %v675, %v755
      %v764 = vadd.f32 %v676, %v760
      %s765 = scalar_lea.vmem [#allocation2], 48
      %v766 = vld [vmem:[%s765] sm:$0xff]
      %v767 = vld [vmem:[%s765 + $0x8] sm:$0xff]
      %s768 = scalar_lea.vmem %s1, 96
      %v769 = vld [vmem:[%s768] sm:$0xff]
      %v770 = vld [vmem:[%s768 + $0x8] sm:$0xff]
      %v772 = vsel %vm232, %v766, 0
      %v775 = vsel %vm232, %v767, 0
      %777 = vmatprep.subr.mxu0 0.0
      %778 = vmatpush1.msra.mxu0 0.0
      %779 = vmatprep.subr.mxu0 0.0
      %780 = vmatpush1.msra.mxu0 0.0
      %781 = vmatprep.subr.mxu0 0.0
      %782 = vmatpush1.msra.mxu0 0.0
      %783 = vmatprep.subr.mxu0 0.0
      %784 = vmatpush1.msra.mxu0 0.0
      %785 = vmatprep.subr.mxu0 0.0
      %786 = vmatpush1.msra.mxu0 0.0
      %787 = vmatprep.subr.mxu0 0.0
      %788 = vmatpush1.msra.mxu0 0.0
      %789 = vmatprep.subr.mxu0 0.0
      %790 = vmatpush1.msra.mxu0 0.0
      %791 = vmatprep.subr.mxu0 0.0
      %792 = vmatpush1.msra.mxu0 0.0
      %793 = vmatprep.subr.mxu0 0.0
      %794 = vmatpush1.msra.mxu0 0.0
      %795 = vmatprep.subr.mxu0 0.0
      %796 = vmatpush1.msra.mxu0 0.0
      %797 = vmatprep.subr.mxu0 0.0
      %798 = vmatpush1.msra.mxu0 0.0
      %799 = vmatprep.subr.mxu0 0.0
      %800 = vmatpush1.msra.mxu0 0.0
      %801 = vmatprep.subr.mxu0 0.0
      %802 = vmatpush1.msra.mxu0 0.0
      %803 = vmatprep.subr.mxu0 0.0
      %804 = vmatpush1.msra.mxu0 0.0
      %805 = vmatprep.subr.mxu0 0.0
      %806 = vmatpush1.msra.mxu0 %v770
      %807 = vmatprep.subr.mxu0 0.0
      %808 = vmatpush1.msra.mxu0 %v769
      %809 = vmatprep.subr.mxu0 0.0
      %810 = vmatpush2.msra.mxu0 0.0
      %811 = vmatprep.subr.mxu0 0.0
      %812 = vmatpush2.msra.mxu0 0.0
      %813 = vmatprep.subr.mxu0 0.0
      %814 = vmatpush2.msra.mxu0 0.0
      %815 = vmatprep.subr.mxu0 0.0
      %816 = vmatpush2.msra.mxu0 0.0
      %817 = vmatprep.subr.mxu0 0.0
      %818 = vmatpush2.msra.mxu0 0.0
      %819 = vmatprep.subr.mxu0 0.0
      %820 = vmatpush2.msra.mxu0 0.0
      %821 = vmatprep.subr.mxu0 0.0
      %822 = vmatpush2.msra.mxu0 0.0
      %823 = vmatprep.subr.mxu0 0.0
      %824 = vmatpush2.msra.mxu0 0.0
      %825 = vmatprep.subr.mxu0 0.0
      %826 = vmatpush2.msra.mxu0 0.0
      %827 = vmatprep.subr.mxu0 0.0
      %828 = vmatpush2.msra.mxu0 0.0
      %829 = vmatprep.subr.mxu0 0.0
      %830 = vmatpush2.msra.mxu0 0.0
      %831 = vmatprep.subr.mxu0 0.0
      %832 = vmatpush2.msra.mxu0 0.0
      %833 = vmatprep.subr.mxu0 0.0
      %834 = vmatpush2.msra.mxu0 0.0
      %835 = vmatprep.subr.mxu0 0.0
      %836 = vmatpush2.msra.mxu0 0.0
      %837 = vmatprep.subr.mxu0 0.0
      %838 = vmatpush2.msra.mxu0 0.0
      %839 = vmatprep.subr.mxu0 0.0
      %840 = vmatpush2.msra.mxu0 0.0
      %841 = vmatprep.mubr.f32.mxu0 0.0
      %842 = vmatmul.mubr.f32.gmra.mxu0 %v772
      %v843 = vpop.f32.mrf.mxu0
      %v844 = vadd.f32 0.0, %v843
      %v845 = vpop.f32.mrf.mxu0
      %846 = vmatprep.mubr.f32.mxu0 0.0
      %847 = vmatmul.mubr.f32.gmra.mxu0 %v775
      %v848 = vpop.f32.mrf.mxu0
      %v849 = vadd.f32 0.0, %v848
      %v850 = vpop.f32.mrf.mxu0
      %851 = vdwg.mxu0
      %v852 = vadd.f32 %v763, %v844
      %v853 = vadd.f32 %v764, %v849
      %v854 = vld [vmem:[%s765 + $0x1] sm:$0xff]
      %v855 = vld [vmem:[%s765 + $0x9] sm:$0xff]
      %s856 = scalar_lea.vmem %s1, 112
      %v857 = vld [vmem:[%s856] sm:$0xff]
      %v858 = vld [vmem:[%s856 + $0x8] sm:$0xff]
      %v860 = vsel %vm232, %v854, 0
      %v863 = vsel %vm232, %v855, 0
      %865 = vmatprep.subr.mxu0 0.0
      %866 = vmatpush1.msra.mxu0 0.0
      %867 = vmatprep.subr.mxu0 0.0
      %868 = vmatpush1.msra.mxu0 0.0
      %869 = vmatprep.subr.mxu0 0.0
      %870 = vmatpush1.msra.mxu0 0.0
      %871 = vmatprep.subr.mxu0 0.0
      %872 = vmatpush1.msra.mxu0 0.0
      %873 = vmatprep.subr.mxu0 0.0
      %874 = vmatpush1.msra.mxu0 0.0
      %875 = vmatprep.subr.mxu0 0.0
      %876 = vmatpush1.msra.mxu0 0.0
      %877 = vmatprep.subr.mxu0 0.0
      %878 = vmatpush1.msra.mxu0 0.0
      %879 = vmatprep.subr.mxu0 0.0
      %880 = vmatpush1.msra.mxu0 0.0
      %881 = vmatprep.subr.mxu0 0.0
      %882 = vmatpush1.msra.mxu0 0.0
      %883 = vmatprep.subr.mxu0 0.0
      %884 = vmatpush1.msra.mxu0 0.0
      %885 = vmatprep.subr.mxu0 0.0
      %886 = vmatpush1.msra.mxu0 0.0
      %887 = vmatprep.subr.mxu0 0.0
      %888 = vmatpush1.msra.mxu0 0.0
      %889 = vmatprep.subr.mxu0 0.0
      %890 = vmatpush1.msra.mxu0 0.0
      %891 = vmatprep.subr.mxu0 0.0
      %892 = vmatpush1.msra.mxu0 0.0
      %893 = vmatprep.subr.mxu0 0.0
      %894 = vmatpush1.msra.mxu0 %v858
      %895 = vmatprep.subr.mxu0 0.0
      %896 = vmatpush1.msra.mxu0 %v857
      %897 = vmatprep.subr.mxu0 0.0
      %898 = vmatpush2.msra.mxu0 0.0
      %899 = vmatprep.subr.mxu0 0.0
      %900 = vmatpush2.msra.mxu0 0.0
      %901 = vmatprep.subr.mxu0 0.0
      %902 = vmatpush2.msra.mxu0 0.0
      %903 = vmatprep.subr.mxu0 0.0
      %904 = vmatpush2.msra.mxu0 0.0
      %905 = vmatprep.subr.mxu0 0.0
      %906 = vmatpush2.msra.mxu0 0.0
      %907 = vmatprep.subr.mxu0 0.0
      %908 = vmatpush2.msra.mxu0 0.0
      %909 = vmatprep.subr.mxu0 0.0
      %910 = vmatpush2.msra.mxu0 0.0
      %911 = vmatprep.subr.mxu0 0.0
      %912 = vmatpush2.msra.mxu0 0.0
      %913 = vmatprep.subr.mxu0 0.0
      %914 = vmatpush2.msra.mxu0 0.0
      %915 = vmatprep.subr.mxu0 0.0
      %916 = vmatpush2.msra.mxu0 0.0
      %917 = vmatprep.subr.mxu0 0.0
      %918 = vmatpush2.msra.mxu0 0.0
      %919 = vmatprep.subr.mxu0 0.0
      %920 = vmatpush2.msra.mxu0 0.0
      %921 = vmatprep.subr.mxu0 0.0
      %922 = vmatpush2.msra.mxu0 0.0
      %923 = vmatprep.subr.mxu0 0.0
      %924 = vmatpush2.msra.mxu0 0.0
      %925 = vmatprep.subr.mxu0 0.0
      %926 = vmatpush2.msra.mxu0 0.0
      %927 = vmatprep.subr.mxu0 0.0
      %928 = vmatpush2.msra.mxu0 0.0
      %929 = vmatprep.mubr.f32.mxu0 0.0
      %930 = vmatmul.mubr.f32.gmra.mxu0 %v860
      %v931 = vpop.f32.mrf.mxu0
      %v932 = vadd.f32 0.0, %v931
      %v933 = vpop.f32.mrf.mxu0
      %934 = vmatprep.mubr.f32.mxu0 0.0
      %935 = vmatmul.mubr.f32.gmra.mxu0 %v863
      %v936 = vpop.f32.mrf.mxu0
      %v937 = vadd.f32 0.0, %v936
      %v938 = vpop.f32.mrf.mxu0
      %939 = vdwg.mxu0
      %v940 = vadd.f32 %v852, %v932
      %v941 = vadd.f32 %v853, %v937
      %v942 = vld [vmem:[%s765 + $0x2] sm:$0xff]
      %v943 = vld [vmem:[%s765 + $0xa] sm:$0xff]
      %s944 = scalar_lea.vmem %s1, 128
      %v945 = vld [vmem:[%s944] sm:$0xff]
      %v946 = vld [vmem:[%s944 + $0x8] sm:$0xff]
      %v948 = vsel %vm232, %v942, 0
      %v951 = vsel %vm232, %v943, 0
      %953 = vmatprep.subr.mxu0 0.0
      %954 = vmatpush1.msra.mxu0 0.0
      %955 = vmatprep.subr.mxu0 0.0
      %956 = vmatpush1.msra.mxu0 0.0
      %957 = vmatprep.subr.mxu0 0.0
      %958 = vmatpush1.msra.mxu0 0.0
      %959 = vmatprep.subr.mxu0 0.0
      %960 = vmatpush1.msra.mxu0 0.0
      %961 = vmatprep.subr.mxu0 0.0
      %962 = vmatpush1.msra.mxu0 0.0
      %963 = vmatprep.subr.mxu0 0.0
      %964 = vmatpush1.msra.mxu0 0.0
      %965 = vmatprep.subr.mxu0 0.0
      %966 = vmatpush1.msra.mxu0 0.0
      %967 = vmatprep.subr.mxu0 0.0
      %968 = vmatpush1.msra.mxu0 0.0
      %969 = vmatprep.subr.mxu0 0.0
      %970 = vmatpush1.msra.mxu0 0.0
      %971 = vmatprep.subr.mxu0 0.0
      %972 = vmatpush1.msra.mxu0 0.0
      %973 = vmatprep.subr.mxu0 0.0
      %974 = vmatpush1.msra.mxu0 0.0
      %975 = vmatprep.subr.mxu0 0.0
      %976 = vmatpush1.msra.mxu0 0.0
      %977 = vmatprep.subr.mxu0 0.0
      %978 = vmatpush1.msra.mxu0 0.0
      %979 = vmatprep.subr.mxu0 0.0
      %980 = vmatpush1.msra.mxu0 0.0
      %981 = vmatprep.subr.mxu0 0.0
      %982 = vmatpush1.msra.mxu0 %v946
      %983 = vmatprep.subr.mxu0 0.0
      %984 = vmatpush1.msra.mxu0 %v945
      %985 = vmatprep.subr.mxu0 0.0
      %986 = vmatpush2.msra.mxu0 0.0
      %987 = vmatprep.subr.mxu0 0.0
      %988 = vmatpush2.msra.mxu0 0.0
      %989 = vmatprep.subr.mxu0 0.0
      %990 = vmatpush2.msra.mxu0 0.0
      %991 = vmatprep.subr.mxu0 0.0
      %992 = vmatpush2.msra.mxu0 0.0
      %993 = vmatprep.subr.mxu0 0.0
      %994 = vmatpush2.msra.mxu0 0.0
      %995 = vmatprep.subr.mxu0 0.0
      %996 = vmatpush2.msra.mxu0 0.0
      %997 = vmatprep.subr.mxu0 0.0
      %998 = vmatpush2.msra.mxu0 0.0
      %999 = vmatprep.subr.mxu0 0.0
      %1000 = vmatpush2.msra.mxu0 0.0
      %1001 = vmatprep.subr.mxu0 0.0
      %1002 = vmatpush2.msra.mxu0 0.0
      %1003 = vmatprep.subr.mxu0 0.0
      %1004 = vmatpush2.msra.mxu0 0.0
      %1005 = vmatprep.subr.mxu0 0.0
      %1006 = vmatpush2.msra.mxu0 0.0
      %1007 = vmatprep.subr.mxu0 0.0
      %1008 = vmatpush2.msra.mxu0 0.0
      %1009 = vmatprep.subr.mxu0 0.0
      %1010 = vmatpush2.msra.mxu0 0.0
      %1011 = vmatprep.subr.mxu0 0.0
      %1012 = vmatpush2.msra.mxu0 0.0
      %1013 = vmatprep.subr.mxu0 0.0
      %1014 = vmatpush2.msra.mxu0 0.0
      %1015 = vmatprep.subr.mxu0 0.0
      %1016 = vmatpush2.msra.mxu0 0.0
      %1017 = vmatprep.mubr.f32.mxu0 0.0
      %1018 = vmatmul.mubr.f32.gmra.mxu0 %v948
      %v1019 = vpop.f32.mrf.mxu0
      %v1020 = vadd.f32 0.0, %v1019
      %v1021 = vpop.f32.mrf.mxu0
      %1022 = vmatprep.mubr.f32.mxu0 0.0
      %1023 = vmatmul.mubr.f32.gmra.mxu0 %v951
      %v1024 = vpop.f32.mrf.mxu0
      %v1025 = vadd.f32 0.0, %v1024
      %v1026 = vpop.f32.mrf.mxu0
      %1027 = vdwg.mxu0
      %v1028 = vadd.f32 %v940, %v1020
      %v1029 = vadd.f32 %v941, %v1025
      %s1030 = scalar_lea.vmem [#allocation2], 72
      %v1031 = vld [vmem:[%s1030] sm:$0xff]
      %v1032 = vld [vmem:[%s1030 + $0x8] sm:$0xff]
      %s1033 = scalar_lea.vmem %s1, 144
      %v1034 = vld [vmem:[%s1033] sm:$0xff]
      %v1035 = vld [vmem:[%s1033 + $0x8] sm:$0xff]
      %v1037 = vsel %vm232, %v1031, 0
      %v1040 = vsel %vm232, %v1032, 0
      %1042 = vmatprep.subr.mxu0 0.0
      %1043 = vmatpush1.msra.mxu0 0.0
      %1044 = vmatprep.subr.mxu0 0.0
      %1045 = vmatpush1.msra.mxu0 0.0
      %1046 = vmatprep.subr.mxu0 0.0
      %1047 = vmatpush1.msra.mxu0 0.0
      %1048 = vmatprep.subr.mxu0 0.0
      %1049 = vmatpush1.msra.mxu0 0.0
      %1050 = vmatprep.subr.mxu0 0.0
      %1051 = vmatpush1.msra.mxu0 0.0
      %1052 = vmatprep.subr.mxu0 0.0
      %1053 = vmatpush1.msra.mxu0 0.0
      %1054 = vmatprep.subr.mxu0 0.0
      %1055 = vmatpush1.msra.mxu0 0.0
      %1056 = vmatprep.subr.mxu0 0.0
      %1057 = vmatpush1.msra.mxu0 0.0
      %1058 = vmatprep.subr.mxu0 0.0
      %1059 = vmatpush1.msra.mxu0 0.0
      %1060 = vmatprep.subr.mxu0 0.0
      %1061 = vmatpush1.msra.mxu0 0.0
      %1062 = vmatprep.subr.mxu0 0.0
      %1063 = vmatpush1.msra.mxu0 0.0
      %1064 = vmatprep.subr.mxu0 0.0
      %1065 = vmatpush1.msra.mxu0 0.0
      %1066 = vmatprep.subr.mxu0 0.0
      %1067 = vmatpush1.msra.mxu0 0.0
      %1068 = vmatprep.subr.mxu0 0.0
      %1069 = vmatpush1.msra.mxu0 0.0
      %1070 = vmatprep.subr.mxu0 0.0
      %1071 = vmatpush1.msra.mxu0 %v1035
      %1072 = vmatprep.subr.mxu0 0.0
      %1073 = vmatpush1.msra.mxu0 %v1034
      %1074 = vmatprep.subr.mxu0 0.0
      %1075 = vmatpush2.msra.mxu0 0.0
      %1076 = vmatprep.subr.mxu0 0.0
      %1077 = vmatpush2.msra.mxu0 0.0
      %1078 = vmatprep.subr.mxu0 0.0
      %1079 = vmatpush2.msra.mxu0 0.0
      %1080 = vmatprep.subr.mxu0 0.0
      %1081 = vmatpush2.msra.mxu0 0.0
      %1082 = vmatprep.subr.mxu0 0.0
      %1083 = vmatpush2.msra.mxu0 0.0
      %1084 = vmatprep.subr.mxu0 0.0
      %1085 = vmatpush2.msra.mxu0 0.0
      %1086 = vmatprep.subr.mxu0 0.0
      %1087 = vmatpush2.msra.mxu0 0.0
      %1088 = vmatprep.subr.mxu0 0.0
      %1089 = vmatpush2.msra.mxu0 0.0
      %1090 = vmatprep.subr.mxu0 0.0
      %1091 = vmatpush2.msra.mxu0 0.0
      %1092 = vmatprep.subr.mxu0 0.0
      %1093 = vmatpush2.msra.mxu0 0.0
      %1094 = vmatprep.subr.mxu0 0.0
      %1095 = vmatpush2.msra.mxu0 0.0
      %1096 = vmatprep.subr.mxu0 0.0
      %1097 = vmatpush2.msra.mxu0 0.0
      %1098 = vmatprep.subr.mxu0 0.0
      %1099 = vmatpush2.msra.mxu0 0.0
      %1100 = vmatprep.subr.mxu0 0.0
      %1101 = vmatpush2.msra.mxu0 0.0
      %1102 = vmatprep.subr.mxu0 0.0
      %1103 = vmatpush2.msra.mxu0 0.0
      %1104 = vmatprep.subr.mxu0 0.0
      %1105 = vmatpush2.msra.mxu0 0.0
      %1106 = vmatprep.mubr.f32.mxu0 0.0
      %1107 = vmatmul.mubr.f32.gmra.mxu0 %v1037
      %v1108 = vpop.f32.mrf.mxu0
      %v1109 = vadd.f32 0.0, %v1108
      %v1110 = vpop.f32.mrf.mxu0
      %1111 = vmatprep.mubr.f32.mxu0 0.0
      %1112 = vmatmul.mubr.f32.gmra.mxu0 %v1040
      %v1113 = vpop.f32.mrf.mxu0
      %v1114 = vadd.f32 0.0, %v1113
      %v1115 = vpop.f32.mrf.mxu0
      %1116 = vdwg.mxu0
      %v1117 = vadd.f32 %v1028, %v1109
      %v1118 = vadd.f32 %v1029, %v1114
      %v1119 = vld [vmem:[%s1030 + $0x1] sm:$0xff]
      %v1120 = vld [vmem:[%s1030 + $0x9] sm:$0xff]
      %s1121 = scalar_lea.vmem %s1, 160
      %v1122 = vld [vmem:[%s1121] sm:$0xff]
      %v1123 = vld [vmem:[%s1121 + $0x8] sm:$0xff]
      %v1125 = vsel %vm232, %v1119, 0
      %v1128 = vsel %vm232, %v1120, 0
      %1130 = vmatprep.subr.mxu0 0.0
      %1131 = vmatpush1.msra.mxu0 0.0
      %1132 = vmatprep.subr.mxu0 0.0
      %1133 = vmatpush1.msra.mxu0 0.0
      %1134 = vmatprep.subr.mxu0 0.0
      %1135 = vmatpush1.msra.mxu0 0.0
      %1136 = vmatprep.subr.mxu0 0.0
      %1137 = vmatpush1.msra.mxu0 0.0
      %1138 = vmatprep.subr.mxu0 0.0
      %1139 = vmatpush1.msra.mxu0 0.0
      %1140 = vmatprep.subr.mxu0 0.0
      %1141 = vmatpush1.msra.mxu0 0.0
      %1142 = vmatprep.subr.mxu0 0.0
      %1143 = vmatpush1.msra.mxu0 0.0
      %1144 = vmatprep.subr.mxu0 0.0
      %1145 = vmatpush1.msra.mxu0 0.0
      %1146 = vmatprep.subr.mxu0 0.0
      %1147 = vmatpush1.msra.mxu0 0.0
      %1148 = vmatprep.subr.mxu0 0.0
      %1149 = vmatpush1.msra.mxu0 0.0
      %1150 = vmatprep.subr.mxu0 0.0
      %1151 = vmatpush1.msra.mxu0 0.0
      %1152 = vmatprep.subr.mxu0 0.0
      %1153 = vmatpush1.msra.mxu0 0.0
      %1154 = vmatprep.subr.mxu0 0.0
      %1155 = vmatpush1.msra.mxu0 0.0
      %1156 = vmatprep.subr.mxu0 0.0
      %1157 = vmatpush1.msra.mxu0 0.0
      %1158 = vmatprep.subr.mxu0 0.0
      %1159 = vmatpush1.msra.mxu0 %v1123
      %1160 = vmatprep.subr.mxu0 0.0
      %1161 = vmatpush1.msra.mxu0 %v1122
      %1162 = vmatprep.subr.mxu0 0.0
      %1163 = vmatpush2.msra.mxu0 0.0
      %1164 = vmatprep.subr.mxu0 0.0
      %1165 = vmatpush2.msra.mxu0 0.0
      %1166 = vmatprep.subr.mxu0 0.0
      %1167 = vmatpush2.msra.mxu0 0.0
      %1168 = vmatprep.subr.mxu0 0.0
      %1169 = vmatpush2.msra.mxu0 0.0
      %1170 = vmatprep.subr.mxu0 0.0
      %1171 = vmatpush2.msra.mxu0 0.0
      %1172 = vmatprep.subr.mxu0 0.0
      %1173 = vmatpush2.msra.mxu0 0.0
      %1174 = vmatprep.subr.mxu0 0.0
      %1175 = vmatpush2.msra.mxu0 0.0
      %1176 = vmatprep.subr.mxu0 0.0
      %1177 = vmatpush2.msra.mxu0 0.0
      %1178 = vmatprep.subr.mxu0 0.0
      %1179 = vmatpush2.msra.mxu0 0.0
      %1180 = vmatprep.subr.mxu0 0.0
      %1181 = vmatpush2.msra.mxu0 0.0
      %1182 = vmatprep.subr.mxu0 0.0
      %1183 = vmatpush2.msra.mxu0 0.0
      %1184 = vmatprep.subr.mxu0 0.0
      %1185 = vmatpush2.msra.mxu0 0.0
      %1186 = vmatprep.subr.mxu0 0.0
      %1187 = vmatpush2.msra.mxu0 0.0
      %1188 = vmatprep.subr.mxu0 0.0
      %1189 = vmatpush2.msra.mxu0 0.0
      %1190 = vmatprep.subr.mxu0 0.0
      %1191 = vmatpush2.msra.mxu0 0.0
      %1192 = vmatprep.subr.mxu0 0.0
      %1193 = vmatpush2.msra.mxu0 0.0
      %1194 = vmatprep.mubr.f32.mxu0 0.0
      %1195 = vmatmul.mubr.f32.gmra.mxu0 %v1125
      %v1196 = vpop.f32.mrf.mxu0
      %v1197 = vadd.f32 0.0, %v1196
      %v1198 = vpop.f32.mrf.mxu0
      %1199 = vmatprep.mubr.f32.mxu0 0.0
      %1200 = vmatmul.mubr.f32.gmra.mxu0 %v1128
      %v1201 = vpop.f32.mrf.mxu0
      %v1202 = vadd.f32 0.0, %v1201
      %v1203 = vpop.f32.mrf.mxu0
      %1204 = vdwg.mxu0
      %v1205 = vadd.f32 %v1117, %v1197
      %v1206 = vadd.f32 %v1118, %v1202
      %v1207 = vld [vmem:[%s1030 + $0x2] sm:$0xff]
      %v1208 = vld [vmem:[%s1030 + $0xa] sm:$0xff]
      %s1209 = scalar_lea.vmem %s1, 176
      %v1210 = vld [vmem:[%s1209] sm:$0xff]
      %v1211 = vld [vmem:[%s1209 + $0x8] sm:$0xff]
      %v1213 = vsel %vm232, %v1207, 0
      %v1216 = vsel %vm232, %v1208, 0
      %1218 = vmatprep.subr.mxu0 0.0
      %1219 = vmatpush1.msra.mxu0 0.0
      %1220 = vmatprep.subr.mxu0 0.0
      %1221 = vmatpush1.msra.mxu0 0.0
      %1222 = vmatprep.subr.mxu0 0.0
      %1223 = vmatpush1.msra.mxu0 0.0
      %1224 = vmatprep.subr.mxu0 0.0
      %1225 = vmatpush1.msra.mxu0 0.0
      %1226 = vmatprep.subr.mxu0 0.0
      %1227 = vmatpush1.msra.mxu0 0.0
      %1228 = vmatprep.subr.mxu0 0.0
      %1229 = vmatpush1.msra.mxu0 0.0
      %1230 = vmatprep.subr.mxu0 0.0
      %1231 = vmatpush1.msra.mxu0 0.0
      %1232 = vmatprep.subr.mxu0 0.0
      %1233 = vmatpush1.msra.mxu0 0.0
      %1234 = vmatprep.subr.mxu0 0.0
      %1235 = vmatpush1.msra.mxu0 0.0
      %1236 = vmatprep.subr.mxu0 0.0
      %1237 = vmatpush1.msra.mxu0 0.0
      %1238 = vmatprep.subr.mxu0 0.0
      %1239 = vmatpush1.msra.mxu0 0.0
      %1240 = vmatprep.subr.mxu0 0.0
      %1241 = vmatpush1.msra.mxu0 0.0
      %1242 = vmatprep.subr.mxu0 0.0
      %1243 = vmatpush1.msra.mxu0 0.0
      %1244 = vmatprep.subr.mxu0 0.0
      %1245 = vmatpush1.msra.mxu0 0.0
      %1246 = vmatprep.subr.mxu0 0.0
      %1247 = vmatpush1.msra.mxu0 %v1211
      %1248 = vmatprep.subr.mxu0 0.0
      %1249 = vmatpush1.msra.mxu0 %v1210
      %1250 = vmatprep.subr.mxu0 0.0
      %1251 = vmatpush2.msra.mxu0 0.0
      %1252 = vmatprep.subr.mxu0 0.0
      %1253 = vmatpush2.msra.mxu0 0.0
      %1254 = vmatprep.subr.mxu0 0.0
      %1255 = vmatpush2.msra.mxu0 0.0
      %1256 = vmatprep.subr.mxu0 0.0
      %1257 = vmatpush2.msra.mxu0 0.0
      %1258 = vmatprep.subr.mxu0 0.0
      %1259 = vmatpush2.msra.mxu0 0.0
      %1260 = vmatprep.subr.mxu0 0.0
      %1261 = vmatpush2.msra.mxu0 0.0
      %1262 = vmatprep.subr.mxu0 0.0
      %1263 = vmatpush2.msra.mxu0 0.0
      %1264 = vmatprep.subr.mxu0 0.0
      %1265 = vmatpush2.msra.mxu0 0.0
      %1266 = vmatprep.subr.mxu0 0.0
      %1267 = vmatpush2.msra.mxu0 0.0
      %1268 = vmatprep.subr.mxu0 0.0
      %1269 = vmatpush2.msra.mxu0 0.0
      %1270 = vmatprep.subr.mxu0 0.0
      %1271 = vmatpush2.msra.mxu0 0.0
      %1272 = vmatprep.subr.mxu0 0.0
      %1273 = vmatpush2.msra.mxu0 0.0
      %1274 = vmatprep.subr.mxu0 0.0
      %1275 = vmatpush2.msra.mxu0 0.0
      %1276 = vmatprep.subr.mxu0 0.0
      %1277 = vmatpush2.msra.mxu0 0.0
      %1278 = vmatprep.subr.mxu0 0.0
      %1279 = vmatpush2.msra.mxu0 0.0
      %1280 = vmatprep.subr.mxu0 0.0
      %1281 = vmatpush2.msra.mxu0 0.0
      %1282 = vmatprep.mubr.f32.mxu0 0.0
      %1283 = vmatmul.mubr.f32.gmra.mxu0 %v1213
      %v1284 = vpop.f32.mrf.mxu0
      %v1285 = vadd.f32 0.0, %v1284
      %v1286 = vpop.f32.mrf.mxu0
      %1287 = vmatprep.mubr.f32.mxu0 0.0
      %1288 = vmatmul.mubr.f32.gmra.mxu0 %v1216
      %v1289 = vpop.f32.mrf.mxu0
      %v1290 = vadd.f32 0.0, %v1289
      %v1291 = vpop.f32.mrf.mxu0
      %1292 = vdwg.mxu0
      %v1293 = vadd.f32 %v1205, %v1285
      %v1294 = vadd.f32 %v1206, %v1290
      %1295 = vst [vmem:[%s208] sm:$0xff] %v1293
      %1296 = vst [vmem:[%s208 + $0x8] sm:$0xff] %v1294
      %v1297 = vadd.f32 %v1293, %v1294
      %v1298 = vrot.slane %v1297, 4
      %v1299 = vadd.f32 %v1297, %v1298
      %v1300 = vrot.slane %v1299, 2
      %v1301 = vadd.f32 %v1299, %v1300
      %v1302 = vrot.slane %v1301, 1
      %v1303 = vadd.f32 %v1301, %v1302
      %1304 = vst [vmem:[%s211] sm:$0x1] %v1303
      %v1305 = vmul.f32 %v1293, %v1293
      %v1306 = vmul.f32 %v1294, %v1294
      %v1307 = vadd.f32 %v1305, %v1306
      %v1308 = vrot.slane %v1307, 4
      %v1309 = vadd.f32 %v1307, %v1308
      %v1310 = vrot.slane %v1309, 2
      %v1311 = vadd.f32 %v1309, %v1310
      %v1312 = vrot.slane %v1311, 1
      %v1313 = vadd.f32 %v1311, %v1312
      %1314 = vst [vmem:[%s214] sm:$0x1] %v1313
      %p1315 = scmp.lt.s32.totalorder %s16, 1
      %s1316 = scalar_select %p1315, %s16, 1
      %s1317 = smul.addr %s1316, 2
      %s1318 = smul.addr %s1317, 8
      %s1319 = scalar_lea.vmem %s2, %s1318
      %p1320 = scmp.lt.s32.totalorder %s16, 1
      %s1321 = scalar_select %p1320, %s16, 1
      %s1322 = scalar_lea.vmem %s3, %s1321
      %p1323 = scmp.lt.s32.totalorder %s16, 1
      %s1324 = scalar_select %p1323, %s16, 1
      %s1325 = scalar_lea.vmem %s4, %s1324
      // Predicated region
      $region29: #{cnn_layer_forward.2} parent=27 // pred_check
        %p1326 = pneg %p81
      $region30: #{cnn_layer_forward.2} parent=27 // pred_check_branch
        %1328 = sbr.rel (%p1326) target = $region32
      $region31: #{cnn_layer_forward.2} parent=27 // pred_region
        _
      $region32: #{cnn_layer_forward.2} parent=27 // pred_fallthru
        _
      // Predicated region
      $region33: #{cnn_layer_forward.2} parent=27 // pred_check
        %p1329 = pneg %p107
      $region34: #{cnn_layer_forward.2} parent=27 // pred_check_branch
        %1331 = sbr.rel (%p1329) target = $region36
      $region35: #{cnn_layer_forward.2} parent=27 // pred_region
        _
      $region36: #{cnn_layer_forward.2} parent=27 // pred_fallthru
        _
      // Predicated region
      $region37: #{cnn_layer_forward.2} parent=27 // pred_check
        %p1332 = pneg %p133
      $region38: #{cnn_layer_forward.2} parent=27 // pred_check_branch
        %1334 = sbr.rel (%p1332) target = $region40
      $region39: #{cnn_layer_forward.2} parent=27 // pred_region
        _
      $region40: #{cnn_layer_forward.2} parent=27 // pred_fallthru
        _
    $region28: #{cnn_layer_forward.2} parent=5 // pred_fallthru
      _
    %p1335 = scmp.le.s32.totalorder 2, %s11
    // Predicated region
    $region41: #{cnn_layer_forward.2} parent=5 // pred_check
      %p1336 = pneg %p1335
    $region42: #{cnn_layer_forward.2} parent=5 // pred_check_branch
      %1338 = sbr.rel (%p1336) target = $region44
    $region43: #{cnn_layer_forward.2} parent=5 // pred_region
      %s1339 = ssub.s32 %s11, 2
      // Predicated region
      $region45: #{cnn_layer_forward.2} parent=43 // pred_check
        %p1340 = pneg %p87
      $region46: #{cnn_layer_forward.2} parent=43 // pred_check_branch
        %1342 = sbr.rel (%p1340) target = $region48
      $region47: #{cnn_layer_forward.2} parent=43 // pred_region
        %p1343 = scmp.lt.s32.totalorder %s17, 1
        %s1344 = scalar_select %p1343, %s17, 1
        %s1345 = smul.addr %s1344, 2
        %s1346 = smul.addr %s1345, 8
        %s1347 = scalar_lea.vmem %s2, %s1346
      $region48: #{cnn_layer_forward.2} parent=43 // pred_fallthru
        _
      // Predicated region
      $region49: #{cnn_layer_forward.2} parent=43 // pred_check
        %p1348 = pneg %p113
      $region50: #{cnn_layer_forward.2} parent=43 // pred_check_branch
        %1350 = sbr.rel (%p1348) target = $region52
      $region51: #{cnn_layer_forward.2} parent=43 // pred_region
        %p1351 = scmp.lt.s32.totalorder %s17, 1
        %s1352 = scalar_select %p1351, %s17, 1
        %s1353 = scalar_lea.vmem %s3, %s1352
      $region52: #{cnn_layer_forward.2} parent=43 // pred_fallthru
        _
      // Predicated region
      $region53: #{cnn_layer_forward.2} parent=43 // pred_check
        %p1354 = pneg %p139
      $region54: #{cnn_layer_forward.2} parent=43 // pred_check_branch
        %1356 = sbr.rel (%p1354) target = $region56
      $region55: #{cnn_layer_forward.2} parent=43 // pred_region
        %p1357 = scmp.lt.s32.totalorder %s17, 1
        %s1358 = scalar_select %p1357, %s17, 1
        %s1359 = scalar_lea.vmem %s4, %s1358
      $region56: #{cnn_layer_forward.2} parent=43 // pred_fallthru
        _
    $region44: #{cnn_layer_forward.2} parent=5 // pred_fallthru
      _
  $region6: #{cnn_layer_forward.2} parent=0 // loop_footer
    %s15 = sadd.s32 1, %s11
  $region7: #{cnn_layer_forward.2} parent=0 // loop_footer_branch
    %10 = sbr.rel target = $region3
  $region8: #{cnn_layer_forward.2} parent=0 // loop_exit
    _

</llo_original>
